<compile_context>
chip_gen: v7x
topology: tpu7x:2x2x1
jax: 0.10.0
libtpu: 0.0.40
codegen_flags: <defaults>
</compile_context>

<pallas_src>
import math
from functools import partial

import jax
import jax.numpy as jnp
from jax.experimental import pallas as pl
from jax.experimental.pallas import tpu as pltpu

_PREC = jax.lax.Precision.DEFAULT  # single-pass MXU (bf16-in / f32-acc)


# ----------------------------------------------------------------------------
# Kernels
# ----------------------------------------------------------------------------

def _mha_proj_ln_kernel(*refs, n_heads, inv_sqrt_dh, eps, has_mask):
    """Fused MHA + output projection + residual + LayerNorm for one
    (batch, query-tile) block."""
    if has_mask:
        (q_ref, k_ref, v_ref, res_ref, mask_ref,
         wq_ref, wk_ref, wv_ref, wo_ref, bo_ref, g_ref, b_ref, o_ref) = refs
    else:
        (q_ref, k_ref, v_ref, res_ref,
         wq_ref, wk_ref, wv_ref, wo_ref, bo_ref, g_ref, b_ref, o_ref) = refs
        mask_ref = None

    f32 = jnp.float32
    q = q_ref[...].astype(f32)        # (tq, D)
    k = k_ref[...].astype(f32)        # (Sk, D)
    v = v_ref[...].astype(f32)        # (Sk, D)

    # Full-D block-diagonal per-head projections (one MXU pass each,
    # contraction dim = D instead of dh).
    qp = jnp.dot(q, wq_ref[...], precision=_PREC, preferred_element_type=f32)
    kp = jnp.dot(k, wk_ref[...], precision=_PREC, preferred_element_type=f32)
    vp = jnp.dot(v, wv_ref[...], precision=_PREC, preferred_element_type=f32)

    D = q.shape[-1]
    dh = D // n_heads
    if has_mask:
        is_pad = mask_ref[...] == 0                       # (tq, Sk) bool
        neg = jnp.float32(-1e20)

    ctx_parts = []
    # TODO(synk): for very long Sk this materializes a full (tq, Sk) score
    # matrix per head; a flash-style Sk-streaming loop would bound VMEM.
    for h in range(n_heads):
        sl = slice(h * dh, (h + 1) * dh)
        qh, kh, vh = qp[:, sl], kp[:, sl], vp[:, sl]
        # s = qh @ kh^T without an explicit transpose.
        s = jax.lax.dot_general(qh, kh, (((1,), (1,)), ((), ())),
                                precision=_PREC, preferred_element_type=f32)
        if has_mask:
            s = jnp.where(is_pad, neg, s)   # torch: masked_fill BEFORE scaling
        s = s * inv_sqrt_dh
        s = s - jnp.max(s, axis=-1, keepdims=True)
        e = jnp.exp(s)
        p = e * pl.reciprocal(jnp.sum(e, axis=-1, keepdims=True), approx=True)
        ctx_parts.append(
            jnp.dot(p, vh, precision=_PREC, preferred_element_type=f32))
    ctx = jnp.concatenate(ctx_parts, axis=-1)             # (tq, D), lane-dense

    # Output projection + bias + residual + LayerNorm, all in-body.
    y = jnp.dot(ctx, wo_ref[...], precision=_PREC, preferred_element_type=f32)
    y = y + bo_ref[...] + res_ref[...].astype(f32)
    mean = jnp.mean(y, axis=-1, keepdims=True)
    c = y - mean
    var = jnp.mean(c * c, axis=-1, keepdims=True)
    yn = c * jax.lax.rsqrt(var + eps)
    o_ref[...] = (yn * g_ref[...] + b_ref[...]).astype(o_ref.dtype)


def _ffn_ln_kernel(x_ref, w1_ref, b1_ref, w3_ref, b3_ref, g_ref, b_ref, o_ref,
                   *, eps):
    """FF1 -> ReLU -> FF3 + residual + LayerNorm for one (batch, S-tile)."""
    f32 = jnp.float32
    x = x_ref[...].astype(f32)                            # (ts, D)
    h = jnp.dot(x, w1_ref[...], precision=_PREC, preferred_element_type=f32)
    h = jnp.maximum(h + b1_ref[...], 0.0)
    y = jnp.dot(h, w3_ref[...], precision=_PREC, preferred_element_type=f32)
    y = y + b3_ref[...] + x
    mean = jnp.mean(y, axis=-1, keepdims=True)
    c = y - mean
    var = jnp.mean(c * c, axis=-1, keepdims=True)
    yn = c * jax.lax.rsqrt(var + eps)
    o_ref[...] = (yn * g_ref[...] + b_ref[...]).astype(o_ref.dtype)


# ----------------------------------------------------------------------------
# Wrappers (BlockSpecs / grids; no per-call transposes or dtype plumbing)
# ----------------------------------------------------------------------------

def _vmem_limit(step_bytes):
    """Scoped VMEM budget: double-buffered blocks + headroom, clamped."""
    return int(min(max(4 * step_bytes + (4 << 20), 32 << 20), 100 << 20))


def _mha_proj_ln_pallas(key, query, value, residual, mask, prep, gamma2, beta2,
                        n_heads, *, eps=1e-5, q_tile=256):
    B, Sk, D = key.shape
    Sq = query.shape[1]
    dh = D // n_heads
    tq = min(Sq, q_tile)
    grid = (B, pl.cdiv(Sq, tq))
    has_mask = mask is not None

    in_specs = [
        pl.BlockSpec((None, tq, D), lambda b, i: (b, i, 0)),   # query rows
        pl.BlockSpec((None, Sk, D), lambda b, i: (b, 0, 0)),   # key (full Sk)
        pl.BlockSpec((None, Sk, D), lambda b, i: (b, 0, 0)),   # value (full Sk)
        pl.BlockSpec((None, tq, D), lambda b, i: (b, i, 0)),   # residual rows
    ]
    args = [query, key, value, residual]
    if has_mask:
        mask_i = jnp.broadcast_to(mask, (Sq, Sk)).astype(jnp.int32)
        in_specs.append(pl.BlockSpec((tq, Sk), lambda b, i: (i, 0)))
        args.append(mask_i)
    in_specs += [
        pl.BlockSpec((D, D), lambda b, i: (0, 0)),   # wq block-diag
        pl.BlockSpec((D, D), lambda b, i: (0, 0)),   # wk block-diag
        pl.BlockSpec((D, D), lambda b, i: (0, 0)),   # wv block-diag
        pl.BlockSpec((D, D), lambda b, i: (0, 0)),   # wo^T
        pl.BlockSpec((1, D), lambda b, i: (0, 0)),   # bo
        pl.BlockSpec((1, D), lambda b, i: (0, 0)),   # gamma
        pl.BlockSpec((1, D), lambda b, i: (0, 0)),   # beta
    ]
    args += [prep["wq_bd"], prep["wk_bd"], prep["wv_bd"], prep["wo_t"],
             prep["bo"], gamma2, beta2]

    # Per-step block + intermediate footprint (f32 elements * 4 bytes).
    step_elems = (3 * tq * D + 2 * Sk * D + 4 * D * D + 3 * D
                  + (tq * Sk if has_mask else 0)
                  + 3 * Sk * D + n_heads * tq * Sk + 2 * tq * D)
    kern = partial(_mha_proj_ln_kernel, n_heads=n_heads,
                   inv_sqrt_dh=1.0 / math.sqrt(dh), eps=eps, has_mask=has_mask)
    return pl.pallas_call(
        kern,
        out_shape=jax.ShapeDtypeStruct((B, Sq, D), residual.dtype),
        grid_spec=pltpu.PrefetchScalarGridSpec(
            num_scalar_prefetch=0,
            grid=grid,
            in_specs=in_specs,
            out_specs=pl.BlockSpec((None, tq, D), lambda b, i: (b, i, 0)),
        ),
        compiler_params=pltpu.CompilerParams(
            dimension_semantics=("parallel", "parallel"),
            vmem_limit_bytes=_vmem_limit(4 * step_elems)),
    )(*args)


def _ffn_ln_pallas(x, w1_t, b1, w3_t, b3, gamma2, beta2, *, eps=1e-5,
                   s_tile=256):
    B, S, D = x.shape
    dff = w1_t.shape[1]
    ts = min(S, s_tile)
    grid = (B, pl.cdiv(S, ts))
    step_elems = (2 * ts * D + D * dff + dff * D + dff + 3 * D
                  + ts * dff + ts * D)
    kern = partial(_ffn_ln_kernel, eps=eps)
    return pl.pallas_call(
        kern,
        out_shape=jax.ShapeDtypeStruct((B, S, D), x.dtype),
        grid_spec=pltpu.PrefetchScalarGridSpec(
            num_scalar_prefetch=0,
            grid=grid,
            in_specs=[
                pl.BlockSpec((None, ts, D), lambda b, i: (b, i, 0)),
                pl.BlockSpec((D, dff), lambda b, i: (0, 0)),
                pl.BlockSpec((1, dff), lambda b, i: (0, 0)),
                pl.BlockSpec((dff, D), lambda b, i: (0, 0)),
                pl.BlockSpec((1, D), lambda b, i: (0, 0)),
                pl.BlockSpec((1, D), lambda b, i: (0, 0)),
                pl.BlockSpec((1, D), lambda b, i: (0, 0)),
            ],
            out_specs=pl.BlockSpec((None, ts, D), lambda b, i: (b, i, 0)),
        ),
        compiler_params=pltpu.CompilerParams(
            dimension_semantics=("parallel", "parallel"),
            vmem_limit_bytes=_vmem_limit(4 * step_elems)),
    )(x, w1_t, b1, w3_t, b3, gamma2, beta2)


# ----------------------------------------------------------------------------
# DecoderBlock module (Pallas forward)
# ----------------------------------------------------------------------------

class DecoderBlock:
    """Forward pass of Cunet_v6 DecoderBlock with fused Pallas TPU kernels."""

    DEC_HEADS = 8  # torch module hard-codes MultiHeadAttention(embed_dim, n_heads=8)

    def __init__(self, embed_dim, expansion_factor=2, n_heads=4, *, rng):
        assert embed_dim % self.DEC_HEADS == 0 and embed_dim % n_heads == 0
        self.embed_dim = embed_dim
        self.n_heads = n_heads
        D = embed_dim
        dh_dec = D // self.DEC_HEADS
        dh_tb = D // n_heads
        dff = expansion_factor * embed_dim

        ks = jax.random.split(rng, 18)
        s = 0.1

        def w(k, shape):
            return jax.random.normal(k, shape, jnp.float32) * s

        self.params = {
            "dec_attn": {
                "wq": w(ks[0], (dh_dec, dh_dec)),
                "wk": w(ks[1], (dh_dec, dh_dec)),
                "wv": w(ks[2], (dh_dec, dh_dec)),
                "wo": w(ks[3], (D, D)),
                "bo": w(ks[4], (D,)),
            },
            "norm_g": 1.0 + w(ks[5], (D,)),
            "norm_b": w(ks[6], (D,)),
            "tb_attn": {
                "wq": w(ks[7], (dh_tb, dh_tb)),
                "wk": w(ks[8], (dh_tb, dh_tb)),
                "wv": w(ks[9], (dh_tb, dh_tb)),
                "wo": w(ks[10], (D, D)),
                "bo": w(ks[11], (D,)),
            },
            "norm1_g": 1.0 + w(ks[12], (D,)),
            "norm1_b": w(ks[13], (D,)),
            "w1": w(ks[14], (dff, D)),
            "b1": w(ks[15], (dff,)),
            "w3": w(ks[16], (D, dff)),
            "b3": w(ks[17], (D,)),
        }

        # Hoisted, kernel-ready parameter layouts (no per-call XLA transposes).
        def mha_prep(p, n_h):
            eye = jnp.eye(n_h, dtype=jnp.float32)
            return {
                "wq_bd": jnp.kron(eye, p["wq"].T),   # (D, D) block-diagonal
                "wk_bd": jnp.kron(eye, p["wk"].T),
                "wv_bd": jnp.kron(eye, p["wv"].T),
                "wo_t": p["wo"].T,                   # y = ctx @ wo^T
                "bo": p["bo"].reshape(1, D),
            }

        p = self.params
        self._prep = {
            "dec": mha_prep(p["dec_attn"], self.DEC_HEADS),
            "tb": mha_prep(p["tb_attn"], n_heads),
            "norm_g": p["norm_g"].reshape(1, D),
            "norm_b": p["norm_b"].reshape(1, D),
            "norm1_g": p["norm1_g"].reshape(1, D),
            "norm1_b": p["norm1_b"].reshape(1, D),
            "w1_t": p["w1"].T,                       # (D, dff)
            "b1": p["b1"].reshape(1, dff),
            "w3_t": p["w3"].T,                       # (dff, D)
            "b3": p["b3"].reshape(1, D),
        }

    def __call__(self, key, query, x, mask):
        pp = self._prep
        # TODO(synk): nn.Dropout(0.2) layers are identity (eval/inference mode).
        # --- decoder masked self-attention (8 heads) + proj + residual + LN ---
        value = _mha_proj_ln_pallas(x, x, x, x, mask, pp["dec"],
                                    pp["norm_g"], pp["norm_b"], self.DEC_HEADS)
        # --- transformer block attention(key, query, value) + proj + res + LN ---
        norm1_out = _mha_proj_ln_pallas(key, query, value, value, None, pp["tb"],
                                        pp["norm1_g"], pp["norm1_b"], self.n_heads)
        # --- feed-forward + residual + LayerNorm (norm1 reused, as in torch) ---
        out = _ffn_ln_pallas(norm1_out, pp["w1_t"], pp["b1"], pp["w3_t"],
                             pp["b3"], pp["norm1_g"], pp["norm1_b"])
        return out


# ----------------------------------------------------------------------------
# Pure-JAX reference (mirrors the torch math) for correctness checking
# ----------------------------------------------------------------------------

def _layer_norm_ref(x, gamma, beta, eps=1e-5):
    mean = jnp.mean(x, axis=-1, keepdims=True)
    var = jnp.mean((x - mean) ** 2, axis=-1, keepdims=True)
    return (x - mean) / jnp.sqrt(var + eps) * gamma + beta


def _mha_ref(key, query, value, mask, p, n_heads):
    B, Sk, D = key.shape
    Sq = query.shape[1]
    dh = D // n_heads
    kh = key.reshape(B, Sk, n_heads, dh)
    qh = query.reshape(B, Sq, n_heads, dh)
    vh = value.reshape(B, Sk, n_heads, dh)
    k = jnp.einsum("bshd,ed->bshe", kh, p["wk"]).transpose(0, 2, 1, 3)
    q = jnp.einsum("bshd,ed->bshe", qh, p["wq"]).transpose(0, 2, 1, 3)
    v = jnp.einsum("bshd,ed->bshe", vh, p["wv"]).transpose(0, 2, 1, 3)
    product = jnp.einsum("bhqd,bhkd->bhqk", q, k)
    if mask is not None:
        product = jnp.where(mask[None, None] == 0, -1e20, product)
    product = product / math.sqrt(dh)
    scores = jax.nn.softmax(product, axis=-1)
    ctx = jnp.einsum("bhqk,bhkd->bhqd", scores, v)
    concat = ctx.transpose(0, 2, 1, 3).reshape(B, Sq, D)
    return concat @ p["wo"].T + p["bo"]


def decoder_block_ref(params, key, query, x, mask, n_heads):
    attention = _mha_ref(x, x, x, mask, params["dec_attn"], DecoderBlock.DEC_HEADS)
    value = _layer_norm_ref(attention + x, params["norm_g"], params["norm_b"])
    attn2 = _mha_ref(key, query, value, None, params["tb_attn"], n_heads)
    norm1_out = _layer_norm_ref(attn2 + value, params["norm1_g"], params["norm1_b"])
    ff = jnp.maximum(norm1_out @ params["w1"].T + params["b1"], 0.0) @ params["w3"].T + params["b3"]
    return _layer_norm_ref(ff + norm1_out, params["norm1_g"], params["norm1_b"])


# ----------------------------------------------------------------------------
# Demo / self-check
# ----------------------------------------------------------------------------

if __name__ == "__main__":
    embed_dim = 64          # divisible by both 8 (decoder heads) and 4 (tb heads)
    expansion_factor = 2
    n_heads = 4
    B, S = 2, 8

    root = jax.random.PRNGKey(0)
    k_params, k_key, k_query, k_x = jax.random.split(root, 4)

    block = DecoderBlock(embed_dim, expansion_factor, n_heads, rng=k_params)

    key_in = jax.random.normal(k_key, (B, S, embed_dim), jnp.float32)
    query_in = jax.random.normal(k_query, (B, S, embed_dim), jnp.float32)
    x_in = jax.random.normal(k_x, (B, S, embed_dim), jnp.float32)
    mask = jnp.tril(jnp.ones((S, S), jnp.float32))   # causal mask for self-attn

    out = block(key_in, query_in, x_in, mask)
    out = jax.block_until_ready(out)

    ref = decoder_block_ref(block.params, key_in, query_in, x_in, mask, n_heads)
    assert out.shape == (B, S, embed_dim)
    err = float(jnp.max(jnp.abs(out - ref)))
    assert err < 3e-2, f"max abs error vs reference: {err}"

    print("KERNEL_OK")
</pallas_src>

<mosaic_0001>
module attributes {stable_mosaic.version = 11 : i64} {
  func.func @_mha_proj_ln_kernel(%arg0: i32, %arg1: i32, %arg2: memref<1x8x64xf32, #tpu.memory_space<vmem>>, %arg3: memref<1x8x64xf32, #tpu.memory_space<vmem>>, %arg4: memref<1x8x64xf32, #tpu.memory_space<vmem>>, %arg5: memref<1x8x64xf32, #tpu.memory_space<vmem>>, %arg6: memref<8x8xi32, #tpu.memory_space<vmem>>, %arg7: memref<64x64xf32, #tpu.memory_space<vmem>>, %arg8: memref<64x64xf32, #tpu.memory_space<vmem>>, %arg9: memref<64x64xf32, #tpu.memory_space<vmem>>, %arg10: memref<64x64xf32, #tpu.memory_space<vmem>>, %arg11: memref<1x64xf32, #tpu.memory_space<vmem>>, %arg12: memref<1x64xf32, #tpu.memory_space<vmem>>, %arg13: memref<1x64xf32, #tpu.memory_space<vmem>>, %arg14: memref<1x8x64xf32, #tpu.memory_space<vmem>>) attributes {dimension_semantics = [#tpu.dimension_semantics<parallel>, #tpu.dimension_semantics<parallel>], iteration_bounds = array<i64: 2, 1>, scalar_prefetch = 0 : i64, scratch_operands = 0 : i64, tpu.core_type = #tpu.core_type<tc>, window_params = [{transform_indices = @transform_0, window_bounds = array<i64: 1, 8, 64>}, {transform_indices = @transform_1, window_bounds = array<i64: 1, 8, 64>}, {transform_indices = @transform_2, window_bounds = array<i64: 1, 8, 64>}, {transform_indices = @transform_3, window_bounds = array<i64: 1, 8, 64>}, {transform_indices = @transform_4, window_bounds = array<i64: 8, 8>}, {pipeline_mode = #tpu.pipeline_mode<synchronous>, transform_indices = @transform_5, window_bounds = array<i64: 64, 64>}, {pipeline_mode = #tpu.pipeline_mode<synchronous>, transform_indices = @transform_6, window_bounds = array<i64: 64, 64>}, {pipeline_mode = #tpu.pipeline_mode<synchronous>, transform_indices = @transform_7, window_bounds = array<i64: 64, 64>}, {pipeline_mode = #tpu.pipeline_mode<synchronous>, transform_indices = @transform_8, window_bounds = array<i64: 64, 64>}, {pipeline_mode = #tpu.pipeline_mode<synchronous>, transform_indices = @transform_9, window_bounds = array<i64: 1, 64>}, {pipeline_mode = #tpu.pipeline_mode<synchronous>, transform_indices = @transform_10, window_bounds = array<i64: 1, 64>}, {pipeline_mode = #tpu.pipeline_mode<synchronous>, transform_indices = @transform_11, window_bounds = array<i64: 1, 64>}, {transform_indices = @transform_12, window_bounds = array<i64: 1, 8, 64>}]} {
    %c0 = arith.constant 0 : index
    %c0_0 = arith.constant 0 : index
    %c0_1 = arith.constant 0 : index
    %0 = vector.load %arg2[%c0, %c0_0, %c0_1] : memref<1x8x64xf32, #tpu.memory_space<vmem>>, vector<1x8x64xf32>
    %1 = vector.shape_cast %0 : vector<1x8x64xf32> to vector<8x64xf32>
    %c0_2 = arith.constant 0 : index
    %c0_3 = arith.constant 0 : index
    %c0_4 = arith.constant 0 : index
    %2 = vector.load %arg3[%c0_2, %c0_3, %c0_4] : memref<1x8x64xf32, #tpu.memory_space<vmem>>, vector<1x8x64xf32>
    %3 = vector.shape_cast %2 : vector<1x8x64xf32> to vector<8x64xf32>
    %c0_5 = arith.constant 0 : index
    %c0_6 = arith.constant 0 : index
    %c0_7 = arith.constant 0 : index
    %4 = vector.load %arg4[%c0_5, %c0_6, %c0_7] : memref<1x8x64xf32, #tpu.memory_space<vmem>>, vector<1x8x64xf32>
    %5 = vector.shape_cast %4 : vector<1x8x64xf32> to vector<8x64xf32>
    %c0_8 = arith.constant 0 : index
    %c0_9 = arith.constant 0 : index
    %6 = vector.load %arg7[%c0_8, %c0_9] : memref<64x64xf32, #tpu.memory_space<vmem>>, vector<64x64xf32>
    %cst = arith.constant dense<0.000000e+00> : vector<8x64xf32>
    %7 = tpu.matmul %1, %6, %cst {dimension_numbers = #tpu.dot_dimension_numbers<[1], [0], [0], [1], [0, 0, 1, 1], [], []>} : vector<8x64xf32>, vector<64x64xf32>, vector<8x64xf32> -> vector<8x64xf32>
    %c0_10 = arith.constant 0 : index
    %c0_11 = arith.constant 0 : index
    %8 = vector.load %arg8[%c0_10, %c0_11] : memref<64x64xf32, #tpu.memory_space<vmem>>, vector<64x64xf32>
    %cst_12 = arith.constant dense<0.000000e+00> : vector<8x64xf32>
    %9 = tpu.matmul %3, %8, %cst_12 {dimension_numbers = #tpu.dot_dimension_numbers<[1], [0], [0], [1], [0, 0, 1, 1], [], []>} : vector<8x64xf32>, vector<64x64xf32>, vector<8x64xf32> -> vector<8x64xf32>
    %c0_13 = arith.constant 0 : index
    %c0_14 = arith.constant 0 : index
    %10 = vector.load %arg9[%c0_13, %c0_14] : memref<64x64xf32, #tpu.memory_space<vmem>>, vector<64x64xf32>
    %cst_15 = arith.constant dense<0.000000e+00> : vector<8x64xf32>
    %11 = tpu.matmul %5, %10, %cst_15 {dimension_numbers = #tpu.dot_dimension_numbers<[1], [0], [0], [1], [0, 0, 1, 1], [], []>} : vector<8x64xf32>, vector<64x64xf32>, vector<8x64xf32> -> vector<8x64xf32>
    %c0_16 = arith.constant 0 : index
    %c0_17 = arith.constant 0 : index
    %12 = vector.load %arg6[%c0_16, %c0_17] : memref<8x8xi32, #tpu.memory_space<vmem>>, vector<8x8xi32>
    %c0_i32 = arith.constant 0 : i32
    %13 = vector.broadcast %c0_i32 : i32 to vector<8x8xi32>
    %14 = arith.cmpi eq, %12, %13 : vector<8x8xi32>
    %15 = vector.extract_strided_slice %7 {offsets = [0, 0], sizes = [8, 8], strides = [1, 1]} : vector<8x64xf32> to vector<8x8xf32>
    %16 = vector.extract_strided_slice %9 {offsets = [0, 0], sizes = [8, 8], strides = [1, 1]} : vector<8x64xf32> to vector<8x8xf32>
    %17 = vector.extract_strided_slice %11 {offsets = [0, 0], sizes = [8, 8], strides = [1, 1]} : vector<8x64xf32> to vector<8x8xf32>
    %cst_18 = arith.constant dense<0.000000e+00> : vector<8x8xf32>
    %18 = tpu.matmul %15, %16, %cst_18 {dimension_numbers = #tpu.dot_dimension_numbers<[1], [1], [0], [0], [0, 0, 1, 0], [], []>} : vector<8x8xf32>, vector<8x8xf32>, vector<8x8xf32> -> vector<8x8xf32>
    %cst_19 = arith.constant -1.000000e+20 : f32
    %19 = vector.broadcast %cst_19 : f32 to vector<8x8xf32>
    %20 = arith.select %14, %19, %18 : vector<8x8xi1>, vector<8x8xf32>
    %cst_20 = arith.constant 0.353553385 : f32
    %21 = vector.broadcast %cst_20 : f32 to vector<8x8xf32>
    %22 = arith.mulf %20, %21 : vector<8x8xf32>
    %cst_21 = arith.constant dense<0xFF800000> : vector<8xf32>
    %23 = vector.multi_reduction <maximumf>, %22, %cst_21 [1] : vector<8x8xf32> to vector<8xf32>
    %24 = vector.shape_cast %23 : vector<8xf32> to vector<8x1xf32>
    %25 = vector.broadcast %24 : vector<8x1xf32> to vector<8x8xf32>
    %26 = arith.subf %22, %25 : vector<8x8xf32>
    %27 = math.exp %26 : vector<8x8xf32>
    %cst_22 = arith.constant dense<0.000000e+00> : vector<8xf32>
    %28 = vector.multi_reduction <add>, %27, %cst_22 [1] : vector<8x8xf32> to vector<8xf32>
    %29 = vector.shape_cast %28 : vector<8xf32> to vector<8x1xf32>
    %30 = tpu.reciprocal %29 {approx = true} : vector<8x1xf32> -> vector<8x1xf32>
    %31 = vector.broadcast %30 : vector<8x1xf32> to vector<8x8xf32>
    %32 = arith.mulf %27, %31 : vector<8x8xf32>
    %cst_23 = arith.constant dense<0.000000e+00> : vector<8x8xf32>
    %33 = tpu.matmul %32, %17, %cst_23 {dimension_numbers = #tpu.dot_dimension_numbers<[1], [0], [0], [1], [0, 0, 1, 1], [], []>} : vector<8x8xf32>, vector<8x8xf32>, vector<8x8xf32> -> vector<8x8xf32>
    %34 = vector.extract_strided_slice %7 {offsets = [0, 8], sizes = [8, 8], strides = [1, 1]} : vector<8x64xf32> to vector<8x8xf32>
    %35 = vector.extract_strided_slice %9 {offsets = [0, 8], sizes = [8, 8], strides = [1, 1]} : vector<8x64xf32> to vector<8x8xf32>
    %36 = vector.extract_strided_slice %11 {offsets = [0, 8], sizes = [8, 8], strides = [1, 1]} : vector<8x64xf32> to vector<8x8xf32>
    %cst_24 = arith.constant dense<0.000000e+00> : vector<8x8xf32>
    %37 = tpu.matmul %34, %35, %cst_24 {dimension_numbers = #tpu.dot_dimension_numbers<[1], [1], [0], [0], [0, 0, 1, 0], [], []>} : vector<8x8xf32>, vector<8x8xf32>, vector<8x8xf32> -> vector<8x8xf32>
    %cst_25 = arith.constant -1.000000e+20 : f32
    %38 = vector.broadcast %cst_25 : f32 to vector<8x8xf32>
    %39 = arith.select %14, %38, %37 : vector<8x8xi1>, vector<8x8xf32>
    %cst_26 = arith.constant 0.353553385 : f32
    %40 = vector.broadcast %cst_26 : f32 to vector<8x8xf32>
    %41 = arith.mulf %39, %40 : vector<8x8xf32>
    %cst_27 = arith.constant dense<0xFF800000> : vector<8xf32>
    %42 = vector.multi_reduction <maximumf>, %41, %cst_27 [1] : vector<8x8xf32> to vector<8xf32>
    %43 = vector.shape_cast %42 : vector<8xf32> to vector<8x1xf32>
    %44 = vector.broadcast %43 : vector<8x1xf32> to vector<8x8xf32>
    %45 = arith.subf %41, %44 : vector<8x8xf32>
    %46 = math.exp %45 : vector<8x8xf32>
    %cst_28 = arith.constant dense<0.000000e+00> : vector<8xf32>
    %47 = vector.multi_reduction <add>, %46, %cst_28 [1] : vector<8x8xf32> to vector<8xf32>
    %48 = vector.shape_cast %47 : vector<8xf32> to vector<8x1xf32>
    %49 = tpu.reciprocal %48 {approx = true} : vector<8x1xf32> -> vector<8x1xf32>
    %50 = vector.broadcast %49 : vector<8x1xf32> to vector<8x8xf32>
    %51 = arith.mulf %46, %50 : vector<8x8xf32>
    %cst_29 = arith.constant dense<0.000000e+00> : vector<8x8xf32>
    %52 = tpu.matmul %51, %36, %cst_29 {dimension_numbers = #tpu.dot_dimension_numbers<[1], [0], [0], [1], [0, 0, 1, 1], [], []>} : vector<8x8xf32>, vector<8x8xf32>, vector<8x8xf32> -> vector<8x8xf32>
    %53 = vector.extract_strided_slice %7 {offsets = [0, 16], sizes = [8, 8], strides = [1, 1]} : vector<8x64xf32> to vector<8x8xf32>
    %54 = vector.extract_strided_slice %9 {offsets = [0, 16], sizes = [8, 8], strides = [1, 1]} : vector<8x64xf32> to vector<8x8xf32>
    %55 = vector.extract_strided_slice %11 {offsets = [0, 16], sizes = [8, 8], strides = [1, 1]} : vector<8x64xf32> to vector<8x8xf32>
    %cst_30 = arith.constant dense<0.000000e+00> : vector<8x8xf32>
    %56 = tpu.matmul %53, %54, %cst_30 {dimension_numbers = #tpu.dot_dimension_numbers<[1], [1], [0], [0], [0, 0, 1, 0], [], []>} : vector<8x8xf32>, vector<8x8xf32>, vector<8x8xf32> -> vector<8x8xf32>
    %cst_31 = arith.constant -1.000000e+20 : f32
    %57 = vector.broadcast %cst_31 : f32 to vector<8x8xf32>
    %58 = arith.select %14, %57, %56 : vector<8x8xi1>, vector<8x8xf32>
    %cst_32 = arith.constant 0.353553385 : f32
    %59 = vector.broadcast %cst_32 : f32 to vector<8x8xf32>
    %60 = arith.mulf %58, %59 : vector<8x8xf32>
    %cst_33 = arith.constant dense<0xFF800000> : vector<8xf32>
    %61 = vector.multi_reduction <maximumf>, %60, %cst_33 [1] : vector<8x8xf32> to vector<8xf32>
    %62 = vector.shape_cast %61 : vector<8xf32> to vector<8x1xf32>
    %63 = vector.broadcast %62 : vector<8x1xf32> to vector<8x8xf32>
    %64 = arith.subf %60, %63 : vector<8x8xf32>
    %65 = math.exp %64 : vector<8x8xf32>
    %cst_34 = arith.constant dense<0.000000e+00> : vector<8xf32>
    %66 = vector.multi_reduction <add>, %65, %cst_34 [1] : vector<8x8xf32> to vector<8xf32>
    %67 = vector.shape_cast %66 : vector<8xf32> to vector<8x1xf32>
    %68 = tpu.reciprocal %67 {approx = true} : vector<8x1xf32> -> vector<8x1xf32>
    %69 = vector.broadcast %68 : vector<8x1xf32> to vector<8x8xf32>
    %70 = arith.mulf %65, %69 : vector<8x8xf32>
    %cst_35 = arith.constant dense<0.000000e+00> : vector<8x8xf32>
    %71 = tpu.matmul %70, %55, %cst_35 {dimension_numbers = #tpu.dot_dimension_numbers<[1], [0], [0], [1], [0, 0, 1, 1], [], []>} : vector<8x8xf32>, vector<8x8xf32>, vector<8x8xf32> -> vector<8x8xf32>
    %72 = vector.extract_strided_slice %7 {offsets = [0, 24], sizes = [8, 8], strides = [1, 1]} : vector<8x64xf32> to vector<8x8xf32>
    %73 = vector.extract_strided_slice %9 {offsets = [0, 24], sizes = [8, 8], strides = [1, 1]} : vector<8x64xf32> to vector<8x8xf32>
    %74 = vector.extract_strided_slice %11 {offsets = [0, 24], sizes = [8, 8], strides = [1, 1]} : vector<8x64xf32> to vector<8x8xf32>
    %cst_36 = arith.constant dense<0.000000e+00> : vector<8x8xf32>
    %75 = tpu.matmul %72, %73, %cst_36 {dimension_numbers = #tpu.dot_dimension_numbers<[1], [1], [0], [0], [0, 0, 1, 0], [], []>} : vector<8x8xf32>, vector<8x8xf32>, vector<8x8xf32> -> vector<8x8xf32>
    %cst_37 = arith.constant -1.000000e+20 : f32
    %76 = vector.broadcast %cst_37 : f32 to vector<8x8xf32>
    %77 = arith.select %14, %76, %75 : vector<8x8xi1>, vector<8x8xf32>
    %cst_38 = arith.constant 0.353553385 : f32
    %78 = vector.broadcast %cst_38 : f32 to vector<8x8xf32>
    %79 = arith.mulf %77, %78 : vector<8x8xf32>
    %cst_39 = arith.constant dense<0xFF800000> : vector<8xf32>
    %80 = vector.multi_reduction <maximumf>, %79, %cst_39 [1] : vector<8x8xf32> to vector<8xf32>
    %81 = vector.shape_cast %80 : vector<8xf32> to vector<8x1xf32>
    %82 = vector.broadcast %81 : vector<8x1xf32> to vector<8x8xf32>
    %83 = arith.subf %79, %82 : vector<8x8xf32>
    %84 = math.exp %83 : vector<8x8xf32>
    %cst_40 = arith.constant dense<0.000000e+00> : vector<8xf32>
    %85 = vector.multi_reduction <add>, %84, %cst_40 [1] : vector<8x8xf32> to vector<8xf32>
    %86 = vector.shape_cast %85 : vector<8xf32> to vector<8x1xf32>
    %87 = tpu.reciprocal %86 {approx = true} : vector<8x1xf32> -> vector<8x1xf32>
    %88 = vector.broadcast %87 : vector<8x1xf32> to vector<8x8xf32>
    %89 = arith.mulf %84, %88 : vector<8x8xf32>
    %cst_41 = arith.constant dense<0.000000e+00> : vector<8x8xf32>
    %90 = tpu.matmul %89, %74, %cst_41 {dimension_numbers = #tpu.dot_dimension_numbers<[1], [0], [0], [1], [0, 0, 1, 1], [], []>} : vector<8x8xf32>, vector<8x8xf32>, vector<8x8xf32> -> vector<8x8xf32>
    %91 = vector.extract_strided_slice %7 {offsets = [0, 32], sizes = [8, 8], strides = [1, 1]} : vector<8x64xf32> to vector<8x8xf32>
    %92 = vector.extract_strided_slice %9 {offsets = [0, 32], sizes = [8, 8], strides = [1, 1]} : vector<8x64xf32> to vector<8x8xf32>
    %93 = vector.extract_strided_slice %11 {offsets = [0, 32], sizes = [8, 8], strides = [1, 1]} : vector<8x64xf32> to vector<8x8xf32>
    %cst_42 = arith.constant dense<0.000000e+00> : vector<8x8xf32>
    %94 = tpu.matmul %91, %92, %cst_42 {dimension_numbers = #tpu.dot_dimension_numbers<[1], [1], [0], [0], [0, 0, 1, 0], [], []>} : vector<8x8xf32>, vector<8x8xf32>, vector<8x8xf32> -> vector<8x8xf32>
    %cst_43 = arith.constant -1.000000e+20 : f32
    %95 = vector.broadcast %cst_43 : f32 to vector<8x8xf32>
    %96 = arith.select %14, %95, %94 : vector<8x8xi1>, vector<8x8xf32>
    %cst_44 = arith.constant 0.353553385 : f32
    %97 = vector.broadcast %cst_44 : f32 to vector<8x8xf32>
    %98 = arith.mulf %96, %97 : vector<8x8xf32>
    %cst_45 = arith.constant dense<0xFF800000> : vector<8xf32>
    %99 = vector.multi_reduction <maximumf>, %98, %cst_45 [1] : vector<8x8xf32> to vector<8xf32>
    %100 = vector.shape_cast %99 : vector<8xf32> to vector<8x1xf32>
    %101 = vector.broadcast %100 : vector<8x1xf32> to vector<8x8xf32>
    %102 = arith.subf %98, %101 : vector<8x8xf32>
    %103 = math.exp %102 : vector<8x8xf32>
    %cst_46 = arith.constant dense<0.000000e+00> : vector<8xf32>
    %104 = vector.multi_reduction <add>, %103, %cst_46 [1] : vector<8x8xf32> to vector<8xf32>
    %105 = vector.shape_cast %104 : vector<8xf32> to vector<8x1xf32>
    %106 = tpu.reciprocal %105 {approx = true} : vector<8x1xf32> -> vector<8x1xf32>
    %107 = vector.broadcast %106 : vector<8x1xf32> to vector<8x8xf32>
    %108 = arith.mulf %103, %107 : vector<8x8xf32>
    %cst_47 = arith.constant dense<0.000000e+00> : vector<8x8xf32>
    %109 = tpu.matmul %108, %93, %cst_47 {dimension_numbers = #tpu.dot_dimension_numbers<[1], [0], [0], [1], [0, 0, 1, 1], [], []>} : vector<8x8xf32>, vector<8x8xf32>, vector<8x8xf32> -> vector<8x8xf32>
    %110 = vector.extract_strided_slice %7 {offsets = [0, 40], sizes = [8, 8], strides = [1, 1]} : vector<8x64xf32> to vector<8x8xf32>
    %111 = vector.extract_strided_slice %9 {offsets = [0, 40], sizes = [8, 8], strides = [1, 1]} : vector<8x64xf32> to vector<8x8xf32>
    %112 = vector.extract_strided_slice %11 {offsets = [0, 40], sizes = [8, 8], strides = [1, 1]} : vector<8x64xf32> to vector<8x8xf32>
    %cst_48 = arith.constant dense<0.000000e+00> : vector<8x8xf32>
    %113 = tpu.matmul %110, %111, %cst_48 {dimension_numbers = #tpu.dot_dimension_numbers<[1], [1], [0], [0], [0, 0, 1, 0], [], []>} : vector<8x8xf32>, vector<8x8xf32>, vector<8x8xf32> -> vector<8x8xf32>
    %cst_49 = arith.constant -1.000000e+20 : f32
    %114 = vector.broadcast %cst_49 : f32 to vector<8x8xf32>
    %115 = arith.select %14, %114, %113 : vector<8x8xi1>, vector<8x8xf32>
    %cst_50 = arith.constant 0.353553385 : f32
    %116 = vector.broadcast %cst_50 : f32 to vector<8x8xf32>
    %117 = arith.mulf %115, %116 : vector<8x8xf32>
    %cst_51 = arith.constant dense<0xFF800000> : vector<8xf32>
    %118 = vector.multi_reduction <maximumf>, %117, %cst_51 [1] : vector<8x8xf32> to vector<8xf32>
    %119 = vector.shape_cast %118 : vector<8xf32> to vector<8x1xf32>
    %120 = vector.broadcast %119 : vector<8x1xf32> to vector<8x8xf32>
    %121 = arith.subf %117, %120 : vector<8x8xf32>
    %122 = math.exp %121 : vector<8x8xf32>
    %cst_52 = arith.constant dense<0.000000e+00> : vector<8xf32>
    %123 = vector.multi_reduction <add>, %122, %cst_52 [1] : vector<8x8xf32> to vector<8xf32>
    %124 = vector.shape_cast %123 : vector<8xf32> to vector<8x1xf32>
    %125 = tpu.reciprocal %124 {approx = true} : vector<8x1xf32> -> vector<8x1xf32>
    %126 = vector.broadcast %125 : vector<8x1xf32> to vector<8x8xf32>
    %127 = arith.mulf %122, %126 : vector<8x8xf32>
    %cst_53 = arith.constant dense<0.000000e+00> : vector<8x8xf32>
    %128 = tpu.matmul %127, %112, %cst_53 {dimension_numbers = #tpu.dot_dimension_numbers<[1], [0], [0], [1], [0, 0, 1, 1], [], []>} : vector<8x8xf32>, vector<8x8xf32>, vector<8x8xf32> -> vector<8x8xf32>
    %129 = vector.extract_strided_slice %7 {offsets = [0, 48], sizes = [8, 8], strides = [1, 1]} : vector<8x64xf32> to vector<8x8xf32>
    %130 = vector.extract_strided_slice %9 {offsets = [0, 48], sizes = [8, 8], strides = [1, 1]} : vector<8x64xf32> to vector<8x8xf32>
    %131 = vector.extract_strided_slice %11 {offsets = [0, 48], sizes = [8, 8], strides = [1, 1]} : vector<8x64xf32> to vector<8x8xf32>
    %cst_54 = arith.constant dense<0.000000e+00> : vector<8x8xf32>
    %132 = tpu.matmul %129, %130, %cst_54 {dimension_numbers = #tpu.dot_dimension_numbers<[1], [1], [0], [0], [0, 0, 1, 0], [], []>} : vector<8x8xf32>, vector<8x8xf32>, vector<8x8xf32> -> vector<8x8xf32>
    %cst_55 = arith.constant -1.000000e+20 : f32
    %133 = vector.broadcast %cst_55 : f32 to vector<8x8xf32>
    %134 = arith.select %14, %133, %132 : vector<8x8xi1>, vector<8x8xf32>
    %cst_56 = arith.constant 0.353553385 : f32
    %135 = vector.broadcast %cst_56 : f32 to vector<8x8xf32>
    %136 = arith.mulf %134, %135 : vector<8x8xf32>
    %cst_57 = arith.constant dense<0xFF800000> : vector<8xf32>
    %137 = vector.multi_reduction <maximumf>, %136, %cst_57 [1] : vector<8x8xf32> to vector<8xf32>
    %138 = vector.shape_cast %137 : vector<8xf32> to vector<8x1xf32>
    %139 = vector.broadcast %138 : vector<8x1xf32> to vector<8x8xf32>
    %140 = arith.subf %136, %139 : vector<8x8xf32>
    %141 = math.exp %140 : vector<8x8xf32>
    %cst_58 = arith.constant dense<0.000000e+00> : vector<8xf32>
    %142 = vector.multi_reduction <add>, %141, %cst_58 [1] : vector<8x8xf32> to vector<8xf32>
    %143 = vector.shape_cast %142 : vector<8xf32> to vector<8x1xf32>
    %144 = tpu.reciprocal %143 {approx = true} : vector<8x1xf32> -> vector<8x1xf32>
    %145 = vector.broadcast %144 : vector<8x1xf32> to vector<8x8xf32>
    %146 = arith.mulf %141, %145 : vector<8x8xf32>
    %cst_59 = arith.constant dense<0.000000e+00> : vector<8x8xf32>
    %147 = tpu.matmul %146, %131, %cst_59 {dimension_numbers = #tpu.dot_dimension_numbers<[1], [0], [0], [1], [0, 0, 1, 1], [], []>} : vector<8x8xf32>, vector<8x8xf32>, vector<8x8xf32> -> vector<8x8xf32>
    %148 = vector.extract_strided_slice %7 {offsets = [0, 56], sizes = [8, 8], strides = [1, 1]} : vector<8x64xf32> to vector<8x8xf32>
    %149 = vector.extract_strided_slice %9 {offsets = [0, 56], sizes = [8, 8], strides = [1, 1]} : vector<8x64xf32> to vector<8x8xf32>
    %150 = vector.extract_strided_slice %11 {offsets = [0, 56], sizes = [8, 8], strides = [1, 1]} : vector<8x64xf32> to vector<8x8xf32>
    %cst_60 = arith.constant dense<0.000000e+00> : vector<8x8xf32>
    %151 = tpu.matmul %148, %149, %cst_60 {dimension_numbers = #tpu.dot_dimension_numbers<[1], [1], [0], [0], [0, 0, 1, 0], [], []>} : vector<8x8xf32>, vector<8x8xf32>, vector<8x8xf32> -> vector<8x8xf32>
    %cst_61 = arith.constant -1.000000e+20 : f32
    %152 = vector.broadcast %cst_61 : f32 to vector<8x8xf32>
    %153 = arith.select %14, %152, %151 : vector<8x8xi1>, vector<8x8xf32>
    %cst_62 = arith.constant 0.353553385 : f32
    %154 = vector.broadcast %cst_62 : f32 to vector<8x8xf32>
    %155 = arith.mulf %153, %154 : vector<8x8xf32>
    %cst_63 = arith.constant dense<0xFF800000> : vector<8xf32>
    %156 = vector.multi_reduction <maximumf>, %155, %cst_63 [1] : vector<8x8xf32> to vector<8xf32>
    %157 = vector.shape_cast %156 : vector<8xf32> to vector<8x1xf32>
    %158 = vector.broadcast %157 : vector<8x1xf32> to vector<8x8xf32>
    %159 = arith.subf %155, %158 : vector<8x8xf32>
    %160 = math.exp %159 : vector<8x8xf32>
    %cst_64 = arith.constant dense<0.000000e+00> : vector<8xf32>
    %161 = vector.multi_reduction <add>, %160, %cst_64 [1] : vector<8x8xf32> to vector<8xf32>
    %162 = vector.shape_cast %161 : vector<8xf32> to vector<8x1xf32>
    %163 = tpu.reciprocal %162 {approx = true} : vector<8x1xf32> -> vector<8x1xf32>
    %164 = vector.broadcast %163 : vector<8x1xf32> to vector<8x8xf32>
    %165 = arith.mulf %160, %164 : vector<8x8xf32>
    %cst_65 = arith.constant dense<0.000000e+00> : vector<8x8xf32>
    %166 = tpu.matmul %165, %150, %cst_65 {dimension_numbers = #tpu.dot_dimension_numbers<[1], [0], [0], [1], [0, 0, 1, 1], [], []>} : vector<8x8xf32>, vector<8x8xf32>, vector<8x8xf32> -> vector<8x8xf32>
    %167 = tpu.concatenate %33, %52, %71, %90, %109, %128, %147, %166 in 1 : vector<8x8xf32>, vector<8x8xf32>, vector<8x8xf32>, vector<8x8xf32>, vector<8x8xf32>, vector<8x8xf32>, vector<8x8xf32>, vector<8x8xf32> -> vector<8x64xf32>
    %c0_66 = arith.constant 0 : index
    %c0_67 = arith.constant 0 : index
    %168 = vector.load %arg10[%c0_66, %c0_67] : memref<64x64xf32, #tpu.memory_space<vmem>>, vector<64x64xf32>
    %cst_68 = arith.constant dense<0.000000e+00> : vector<8x64xf32>
    %169 = tpu.matmul %167, %168, %cst_68 {dimension_numbers = #tpu.dot_dimension_numbers<[1], [0], [0], [1], [0, 0, 1, 1], [], []>} : vector<8x64xf32>, vector<64x64xf32>, vector<8x64xf32> -> vector<8x64xf32>
    %c0_69 = arith.constant 0 : index
    %c0_70 = arith.constant 0 : index
    %170 = vector.load %arg11[%c0_69, %c0_70] : memref<1x64xf32, #tpu.memory_space<vmem>>, vector<1x64xf32>
    %171 = vector.broadcast %170 : vector<1x64xf32> to vector<8x64xf32>
    %172 = arith.addf %169, %171 : vector<8x64xf32>
    %c0_71 = arith.constant 0 : index
    %c0_72 = arith.constant 0 : index
    %c0_73 = arith.constant 0 : index
    %173 = vector.load %arg5[%c0_71, %c0_72, %c0_73] : memref<1x8x64xf32, #tpu.memory_space<vmem>>, vector<1x8x64xf32>
    %174 = vector.shape_cast %173 : vector<1x8x64xf32> to vector<8x64xf32>
    %175 = arith.addf %172, %174 : vector<8x64xf32>
    %cst_74 = arith.constant dense<0.000000e+00> : vector<8xf32>
    %176 = vector.multi_reduction <add>, %175, %cst_74 [1] : vector<8x64xf32> to vector<8xf32>
    %177 = vector.shape_cast %176 : vector<8xf32> to vector<8x1xf32>
    %cst_75 = arith.constant 6.400000e+01 : f32
    %178 = vector.broadcast %cst_75 : f32 to vector<8x1xf32>
    %179 = arith.divf %177, %178 : vector<8x1xf32>
    %180 = vector.broadcast %179 : vector<8x1xf32> to vector<8x64xf32>
    %181 = arith.subf %175, %180 : vector<8x64xf32>
    %182 = arith.mulf %181, %181 : vector<8x64xf32>
    %cst_76 = arith.constant dense<0.000000e+00> : vector<8xf32>
    %183 = vector.multi_reduction <add>, %182, %cst_76 [1] : vector<8x64xf32> to vector<8xf32>
    %184 = vector.shape_cast %183 : vector<8xf32> to vector<8x1xf32>
    %cst_77 = arith.constant 6.400000e+01 : f32
    %185 = vector.broadcast %cst_77 : f32 to vector<8x1xf32>
    %186 = arith.divf %184, %185 : vector<8x1xf32>
    %cst_78 = arith.constant 9.99999974E-6 : f32
    %187 = vector.broadcast %cst_78 : f32 to vector<8x1xf32>
    %188 = arith.addf %186, %187 : vector<8x1xf32>
    %189 = math.rsqrt %188 : vector<8x1xf32>
    %190 = vector.broadcast %189 : vector<8x1xf32> to vector<8x64xf32>
    %191 = arith.mulf %181, %190 : vector<8x64xf32>
    %c0_79 = arith.constant 0 : index
    %c0_80 = arith.constant 0 : index
    %192 = vector.load %arg12[%c0_79, %c0_80] : memref<1x64xf32, #tpu.memory_space<vmem>>, vector<1x64xf32>
    %193 = vector.broadcast %192 : vector<1x64xf32> to vector<8x64xf32>
    %194 = arith.mulf %191, %193 : vector<8x64xf32>
    %c0_81 = arith.constant 0 : index
    %c0_82 = arith.constant 0 : index
    %195 = vector.load %arg13[%c0_81, %c0_82] : memref<1x64xf32, #tpu.memory_space<vmem>>, vector<1x64xf32>
    %196 = vector.broadcast %195 : vector<1x64xf32> to vector<8x64xf32>
    %197 = arith.addf %194, %196 : vector<8x64xf32>
    %c0_83 = arith.constant 0 : index
    %c0_84 = arith.constant 0 : index
    %c0_85 = arith.constant 0 : index
    %198 = vector.load %arg14[%c0_83, %c0_84, %c0_85] : memref<1x8x64xf32, #tpu.memory_space<vmem>>, vector<1x8x64xf32>
    %199 = vector.shape_cast %198 : vector<1x8x64xf32> to vector<8x64xf32>
    %200 = vector.shape_cast %197 : vector<8x64xf32> to vector<1x8x64xf32>
    tpu.vector_store %arg14[%c0_83, %c0_84, %c0_85], %200 {strides = array<i32>} : memref<1x8x64xf32, #tpu.memory_space<vmem>>, vector<1x8x64xf32>,
    return
  }
  func.func @transform_0(%arg0: i32, %arg1: i32) -> (i32, i32, i32) {
    %c0_i32 = arith.constant 0 : i32
    %c0_i32_0 = arith.constant 0 : i32
    return %arg0, %arg1, %c0_i32 : i32, i32, i32
  }
  func.func @transform_1(%arg0: i32, %arg1: i32) -> (i32, i32, i32) {
    %c0_i32 = arith.constant 0 : i32
    %c0_i32_0 = arith.constant 0 : i32
    %c0_i32_1 = arith.constant 0 : i32
    return %arg0, %c0_i32, %c0_i32_0 : i32, i32, i32
  }
  func.func @transform_2(%arg0: i32, %arg1: i32) -> (i32, i32, i32) {
    %c0_i32 = arith.constant 0 : i32
    %c0_i32_0 = arith.constant 0 : i32
    %c0_i32_1 = arith.constant 0 : i32
    return %arg0, %c0_i32, %c0_i32_0 : i32, i32, i32
  }
  func.func @transform_3(%arg0: i32, %arg1: i32) -> (i32, i32, i32) {
    %c0_i32 = arith.constant 0 : i32
    %c0_i32_0 = arith.constant 0 : i32
    return %arg0, %arg1, %c0_i32 : i32, i32, i32
  }
  func.func @transform_4(%arg0: i32, %arg1: i32) -> (i32, i32) {
    %c0_i32 = arith.constant 0 : i32
    %c0_i32_0 = arith.constant 0 : i32
    return %arg1, %c0_i32 : i32, i32
  }
  func.func @transform_5(%arg0: i32, %arg1: i32) -> (i32, i32) {
    %c0_i32 = arith.constant 0 : i32
    %c0_i32_0 = arith.constant 0 : i32
    %c0_i32_1 = arith.constant 0 : i32
    return %c0_i32, %c0_i32_0 : i32, i32
  }
  func.func @transform_6(%arg0: i32, %arg1: i32) -> (i32, i32) {
    %c0_i32 = arith.constant 0 : i32
    %c0_i32_0 = arith.constant 0 : i32
    %c0_i32_1 = arith.constant 0 : i32
    return %c0_i32, %c0_i32_0 : i32, i32
  }
  func.func @transform_7(%arg0: i32, %arg1: i32) -> (i32, i32) {
    %c0_i32 = arith.constant 0 : i32
    %c0_i32_0 = arith.constant 0 : i32
    %c0_i32_1 = arith.constant 0 : i32
    return %c0_i32, %c0_i32_0 : i32, i32
  }
  func.func @transform_8(%arg0: i32, %arg1: i32) -> (i32, i32) {
    %c0_i32 = arith.constant 0 : i32
    %c0_i32_0 = arith.constant 0 : i32
    %c0_i32_1 = arith.constant 0 : i32
    return %c0_i32, %c0_i32_0 : i32, i32
  }
  func.func @transform_9(%arg0: i32, %arg1: i32) -> (i32, i32) {
    %c0_i32 = arith.constant 0 : i32
    %c0_i32_0 = arith.constant 0 : i32
    %c0_i32_1 = arith.constant 0 : i32
    return %c0_i32, %c0_i32_0 : i32, i32
  }
  func.func @transform_10(%arg0: i32, %arg1: i32) -> (i32, i32) {
    %c0_i32 = arith.constant 0 : i32
    %c0_i32_0 = arith.constant 0 : i32
    %c0_i32_1 = arith.constant 0 : i32
    return %c0_i32, %c0_i32_0 : i32, i32
  }
  func.func @transform_11(%arg0: i32, %arg1: i32) -> (i32, i32) {
    %c0_i32 = arith.constant 0 : i32
    %c0_i32_0 = arith.constant 0 : i32
    %c0_i32_1 = arith.constant 0 : i32
    return %c0_i32, %c0_i32_0 : i32, i32
  }
  func.func @transform_12(%arg0: i32, %arg1: i32) -> (i32, i32, i32) {
    %c0_i32 = arith.constant 0 : i32
    %c0_i32_0 = arith.constant 0 : i32
    return %arg0, %arg1, %c0_i32 : i32, i32, i32
  }
}

</mosaic_0001>

<llo_original>
// kernel: tpu_custom_call.1
$region0: #{tpu_custom_call.1}
  #allocation0 [shape = 'u32[]', space=smem, size = 0x4, offset = 0x4, fixed_abs, tag = 'smem constant byte address 0x4 - core index']
  #allocation1 [shape = 'u32[144,128]{1,0:T(1,128)}', space=vmem, size = 0x12000, scoped, tag = 'internal scratch']
  %s0 = inlined_call_operand.hbm [shape: f32[2,8,64], index: 0, kind: input, shape index: {}]
  %s1 = inlined_call_operand.hbm [shape: f32[2,8,64], index: 1, kind: input, shape index: {}]
  %s2 = inlined_call_operand.hbm [shape: f32[2,8,64], index: 2, kind: input, shape index: {}]
  %s3 = inlined_call_operand.hbm [shape: f32[2,8,64], index: 3, kind: input, shape index: {}]
  %s4 = inlined_call_operand.vmem [shape: s32[8,8], index: 4, kind: input, shape index: {}]
  %s5 = inlined_call_operand.hbm [shape: f32[64,64], index: 5, kind: input, shape index: {}]
  %s6 = inlined_call_operand.hbm [shape: f32[64,64], index: 6, kind: input, shape index: {}]
  %s7 = inlined_call_operand.hbm [shape: f32[64,64], index: 7, kind: input, shape index: {}]
  %s8 = inlined_call_operand.hbm [shape: f32[64,64], index: 8, kind: input, shape index: {}]
  %s9 = inlined_call_operand.vmem [shape: f32[1,64], index: 9, kind: input, shape index: {}]
  %s10 = inlined_call_operand.vmem [shape: f32[1,64], index: 10, kind: input, shape index: {}]
  %s11 = inlined_call_operand.vmem [shape: f32[1,64], index: 11, kind: input, shape index: {}]
  %s12 = inlined_call_operand.hbm [shape: f32[2,8,64], index: 12, kind: output, shape index: {}]
  %s13 = sld [smem:[#allocation0]]
  $region113: #{tpu_custom_call.1} parent=0
    _
  %s15 = ssub.s32 1, %s13
  %s16 = scalar_select 0, %s15, %s13
  $region1: #{tpu_custom_call.1} parent=0
    #allocation2 [shape = 'u8[8192]{0}', space=vmem, size = 0x2000, scoped, tag = 'input window, operand 0']
    #allocation3 [shape = 's32[2]{0}', space=sflag, size = 0x8, scoped, tag = 'scoped memory for tpu_custom_call.1']
    #allocation4 [shape = 's32[2]{0}', space=sflag, size = 0x8, scoped, tag = 'scoped memory for tpu_custom_call.1']
    #allocation5 [shape = 'u8[8192]{0}', space=vmem, size = 0x2000, scoped, tag = 'input window, operand 1']
    #allocation6 [shape = 's32[2]{0}', space=sflag, size = 0x8, scoped, tag = 'scoped memory for tpu_custom_call.1']
    #allocation7 [shape = 'u8[8192]{0}', space=vmem, size = 0x2000, scoped, tag = 'input window, operand 2']
    #allocation8 [shape = 'u8[8192]{0}', space=vmem, size = 0x2000, scoped, tag = 'input window, operand 3']
    #allocation9 [shape = 's32[2]{0}', space=sflag, size = 0x8, scoped, tag = 'scoped memory for tpu_custom_call.1']
    #allocation10 [shape = 'u8[32768]{0}', space=vmem, size = 0x8000, scoped, tag = 'input window, operand 5, single buffered']
    #allocation11 [shape = 'u8[32768]{0}', space=vmem, size = 0x8000, scoped, tag = 'input window, operand 6, single buffered']
    #allocation12 [shape = 's32[1]{0}', space=sflag, size = 0x4, scoped, tag = 'scoped memory for tpu_custom_call.1']
    #allocation13 [shape = 'u8[32768]{0}', space=vmem, size = 0x8000, scoped, tag = 'input window, operand 7, single buffered']
    #allocation14 [shape = 'u8[32768]{0}', space=vmem, size = 0x8000, scoped, tag = 'input window, operand 8, single buffered']
    #allocation15 [shape = 's32[1]{0}', space=sflag, size = 0x4, scoped, tag = 'scoped memory for tpu_custom_call.1']
    #allocation16 [shape = 'u8[8192]{0}', space=vmem, size = 0x2000, scoped, tag = 'output window, operand 0']
    %17 = vsyncpa [#allocation3], 0
    %s18 = scalar_lea.sflag [#allocation3], 1
    %19 = vsyncpa %s18, 0
    %20 = vsyncpa [#allocation6], 0
    %s21 = scalar_lea.sflag [#allocation6], 1
    %22 = vsyncpa %s21, 0
    %23 = vsyncpa [#allocation9], 0
    %s24 = scalar_lea.sflag [#allocation9], 1
    %25 = vsyncpa %s24, 0
    %26 = vsyncpa [#allocation12], 0
    %27 = vsyncpa [#allocation15], 0
    %28 = vsyncpa [#allocation4], 0
    %s29 = scalar_lea.sflag [#allocation4], 1
    %30 = vsyncpa %s29, 0
    loop: start=0, step=1, limit=4
    $region2: #{tpu_custom_call.1} parent=1 // loop_pre_header
      _
    $region3: #{tpu_custom_call.1} parent=1 // loop_header
      %s32 = sphi 0, %s36
      %p33 = scmp.ge.s32.totalorder %s32, 4
      %s39 = sphi 0, %s51
      %s40 = sphi 0, %s47
      %s41 = sphi 0, %s39
      %s42 = sphi 0, %s40
      %s43 = sphi 0, %s41
      %s44 = sphi 0, %s42
      %s56 = sphi 0, %s58
      %s59 = sphi 0, %s56
      %s60 = sphi 0, %s59
      %s76 = sphi 0, %s60
      %s82 = sphi 0, %s84
      %s85 = sphi 0, %s82
      %s86 = sphi 0, %s85
      %s102 = sphi 0, %s86
      %s108 = sphi 0, %s110
      %s111 = sphi 0, %s108
      %s112 = sphi 0, %s111
      %s128 = sphi 0, %s112
      %s136 = sphi 0, %s138
      %s139 = sphi 0, %s136
      %s140 = sphi 0, %s139
      %s156 = sphi 0, %s140
      %s162 = sphi 0, %s164
      %s165 = sphi 0, %s162
      %s166 = sphi 0, %s165
      %s182 = sphi 0, %s166
      %s186 = sphi 0, %s186
      %s188 = sphi 0, %s186
      %s189 = sphi 0, %s188
      %s203 = sphi 0, %s189
      %s207 = sphi 0, %s207
      %s209 = sphi 0, %s207
      %s210 = sphi 0, %s209
      %s224 = sphi 0, %s210
      %s228 = sphi 0, %s228
      %s230 = sphi 0, %s228
      %s231 = sphi 0, %s230
      %s245 = sphi 0, %s231
      %s249 = sphi 0, %s249
      %s251 = sphi 0, %s249
      %s252 = sphi 0, %s251
      %s266 = sphi 0, %s252
      %s270 = sphi 0, %s270
      %s272 = sphi 0, %s270
      %s273 = sphi 0, %s272
      %s287 = sphi 0, %s273
      %s291 = sphi 0, %s291
      %s293 = sphi 0, %s291
      %s294 = sphi 0, %s293
      %s308 = sphi 0, %s294
      %s312 = sphi 0, %s312
      %s314 = sphi 0, %s312
      %s315 = sphi 0, %s314
      %s329 = sphi 0, %s315
      %s337 = sphi 0, %s339
      %s340 = sphi 0, %s337
      %s341 = sphi 0, %s340
      %s357 = sphi 0, %s341
    $region4: #{tpu_custom_call.1} parent=1 // loop_header_branch
      %35 = sbr.rel (%p33) target = $region8
    $region5: #{tpu_custom_call.1} parent=1 // loop_body
      %s37 = ssub.s32 %s32, 1
      %s38 = ssub.s32 %s32, 2
      %s45 = sadd.s32 1, %s40
      %p46 = scmp.ge.s32.totalorder %s45, 1
      %s47 = scalar_select %p46, 0, %s45
      %s48 = sadd.s32 1, %s39
      %s49 = scalar_select %p46, %s48, %s39
      %p50 = scmp.ge.s32.totalorder %s49, 2
      %s51 = scalar_select %p50, 0, %s49
      %s52 = ssub.s32 %s39, %s51
      %s53 = ssub.s32 %s40, %s47
      %s54 = sor.u32 %s52, %s53
      %p55 = scmp.eq.s32.totalorder %s54, 0
      %s57 = sadd.s32 %s56, 1
      %s58 = scalar_select %p55, %s56, %s57
      %p61 = pneg %p55
      %p62 = scmp.eq.s32.totalorder %s32, 1
      %p63 = por %p61, %p62
      %p64 = scmp.ne.s32.totalorder %s56, %s59
      %p65 = scmp.eq.s32.totalorder %s32, 0
      %p66 = por %p64, %p65
      %p67 = scmp.ne.s32.totalorder %s56, %s59
      %p68 = scmp.eq.s32.totalorder %s37, 1
      %p69 = por %p67, %p68
      %p70 = scmp.ne.s32.totalorder %s59, %s60
      %p71 = scmp.eq.s32.totalorder %s37, 0
      %p72 = por %p70, %p71
      %p73 = scmp.ne.s32.totalorder %s59, %s60
      %p74 = scmp.eq.s32.totalorder %s38, 1
      %p75 = por %p73, %p74
      %p77 = scmp.ne.s32.totalorder %s60, %s76
      %p78 = scmp.eq.s32.totalorder %s38, 0
      %p79 = por %p77, %p78
      %s80 = ssub.s32 %s39, %s51
      %p81 = scmp.eq.s32.totalorder %s80, 0
      %s83 = sadd.s32 %s82, 1
      %s84 = scalar_select %p81, %s82, %s83
      %p87 = pneg %p81
      %p88 = scmp.eq.s32.totalorder %s32, 1
      %p89 = por %p87, %p88
      %p90 = scmp.ne.s32.totalorder %s82, %s85
      %p91 = scmp.eq.s32.totalorder %s32, 0
      %p92 = por %p90, %p91
      %p93 = scmp.ne.s32.totalorder %s82, %s85
      %p94 = scmp.eq.s32.totalorder %s37, 1
      %p95 = por %p93, %p94
      %p96 = scmp.ne.s32.totalorder %s85, %s86
      %p97 = scmp.eq.s32.totalorder %s37, 0
      %p98 = por %p96, %p97
      %p99 = scmp.ne.s32.totalorder %s85, %s86
      %p100 = scmp.eq.s32.totalorder %s38, 1
      %p101 = por %p99, %p100
      %p103 = scmp.ne.s32.totalorder %s86, %s102
      %p104 = scmp.eq.s32.totalorder %s38, 0
      %p105 = por %p103, %p104
      %s106 = ssub.s32 %s39, %s51
      %p107 = scmp.eq.s32.totalorder %s106, 0
      %s109 = sadd.s32 %s108, 1
      %s110 = scalar_select %p107, %s108, %s109
      %p113 = pneg %p107
      %p114 = scmp.eq.s32.totalorder %s32, 1
      %p115 = por %p113, %p114
      %p116 = scmp.ne.s32.totalorder %s108, %s111
      %p117 = scmp.eq.s32.totalorder %s32, 0
      %p118 = por %p116, %p117
      %p119 = scmp.ne.s32.totalorder %s108, %s111
      %p120 = scmp.eq.s32.totalorder %s37, 1
      %p121 = por %p119, %p120
      %p122 = scmp.ne.s32.totalorder %s111, %s112
      %p123 = scmp.eq.s32.totalorder %s37, 0
      %p124 = por %p122, %p123
      %p125 = scmp.ne.s32.totalorder %s111, %s112
      %p126 = scmp.eq.s32.totalorder %s38, 1
      %p127 = por %p125, %p126
      %p129 = scmp.ne.s32.totalorder %s112, %s128
      %p130 = scmp.eq.s32.totalorder %s38, 0
      %p131 = por %p129, %p130
      %s132 = ssub.s32 %s39, %s51
      %s133 = ssub.s32 %s40, %s47
      %s134 = sor.u32 %s132, %s133
      %p135 = scmp.eq.s32.totalorder %s134, 0
      %s137 = sadd.s32 %s136, 1
      %s138 = scalar_select %p135, %s136, %s137
      %p141 = pneg %p135
      %p142 = scmp.eq.s32.totalorder %s32, 1
      %p143 = por %p141, %p142
      %p144 = scmp.ne.s32.totalorder %s136, %s139
      %p145 = scmp.eq.s32.totalorder %s32, 0
      %p146 = por %p144, %p145
      %p147 = scmp.ne.s32.totalorder %s136, %s139
      %p148 = scmp.eq.s32.totalorder %s37, 1
      %p149 = por %p147, %p148
      %p150 = scmp.ne.s32.totalorder %s139, %s140
      %p151 = scmp.eq.s32.totalorder %s37, 0
      %p152 = por %p150, %p151
      %p153 = scmp.ne.s32.totalorder %s139, %s140
      %p154 = scmp.eq.s32.totalorder %s38, 1
      %p155 = por %p153, %p154
      %p157 = scmp.ne.s32.totalorder %s140, %s156
      %p158 = scmp.eq.s32.totalorder %s38, 0
      %p159 = por %p157, %p158
      %s160 = ssub.s32 %s40, %s47
      %p161 = scmp.eq.s32.totalorder %s160, 0
      %s163 = sadd.s32 %s162, 1
      %s164 = scalar_select %p161, %s162, %s163
      %p167 = pneg %p161
      %p168 = scmp.eq.s32.totalorder %s32, 1
      %p169 = por %p167, %p168
      %p170 = scmp.ne.s32.totalorder %s162, %s165
      %p171 = scmp.eq.s32.totalorder %s32, 0
      %p172 = por %p170, %p171
      %p173 = scmp.ne.s32.totalorder %s162, %s165
      %p174 = scmp.eq.s32.totalorder %s37, 1
      %p175 = por %p173, %p174
      %p176 = scmp.ne.s32.totalorder %s165, %s166
      %p177 = scmp.eq.s32.totalorder %s37, 0
      %p178 = por %p176, %p177
      %p179 = scmp.ne.s32.totalorder %s165, %s166
      %p180 = scmp.eq.s32.totalorder %s38, 1
      %p181 = por %p179, %p180
      %p183 = scmp.ne.s32.totalorder %s166, %s182
      %p184 = scmp.eq.s32.totalorder %s38, 0
      %p185 = por %p183, %p184
      %s187 = sadd.s32 %s186, 1
      %p190 = scmp.eq.s32.totalorder %s32, 1
      %p191 = scmp.ne.s32.totalorder %s186, %s188
      %p192 = scmp.eq.s32.totalorder %s32, 0
      %p193 = por %p191, %p192
      %p194 = scmp.ne.s32.totalorder %s186, %s188
      %p195 = scmp.eq.s32.totalorder %s37, 1
      %p196 = por %p194, %p195
      %p197 = scmp.ne.s32.totalorder %s188, %s189
      %p198 = scmp.eq.s32.totalorder %s37, 0
      %p199 = por %p197, %p198
      %p200 = scmp.ne.s32.totalorder %s188, %s189
      %p201 = scmp.eq.s32.totalorder %s38, 1
      %p202 = por %p200, %p201
      %p204 = scmp.ne.s32.totalorder %s189, %s203
      %p205 = scmp.eq.s32.totalorder %s38, 0
      %p206 = por %p204, %p205
      %s208 = sadd.s32 %s207, 1
      %p211 = scmp.eq.s32.totalorder %s32, 1
      %p212 = scmp.ne.s32.totalorder %s207, %s209
      %p213 = scmp.eq.s32.totalorder %s32, 0
      %p214 = por %p212, %p213
      %p215 = scmp.ne.s32.totalorder %s207, %s209
      %p216 = scmp.eq.s32.totalorder %s37, 1
      %p217 = por %p215, %p216
      %p218 = scmp.ne.s32.totalorder %s209, %s210
      %p219 = scmp.eq.s32.totalorder %s37, 0
      %p220 = por %p218, %p219
      %p221 = scmp.ne.s32.totalorder %s209, %s210
      %p222 = scmp.eq.s32.totalorder %s38, 1
      %p223 = por %p221, %p222
      %p225 = scmp.ne.s32.totalorder %s210, %s224
      %p226 = scmp.eq.s32.totalorder %s38, 0
      %p227 = por %p225, %p226
      %s229 = sadd.s32 %s228, 1
      %p232 = scmp.eq.s32.totalorder %s32, 1
      %p233 = scmp.ne.s32.totalorder %s228, %s230
      %p234 = scmp.eq.s32.totalorder %s32, 0
      %p235 = por %p233, %p234
      %p236 = scmp.ne.s32.totalorder %s228, %s230
      %p237 = scmp.eq.s32.totalorder %s37, 1
      %p238 = por %p236, %p237
      %p239 = scmp.ne.s32.totalorder %s230, %s231
      %p240 = scmp.eq.s32.totalorder %s37, 0
      %p241 = por %p239, %p240
      %p242 = scmp.ne.s32.totalorder %s230, %s231
      %p243 = scmp.eq.s32.totalorder %s38, 1
      %p244 = por %p242, %p243
      %p246 = scmp.ne.s32.totalorder %s231, %s245
      %p247 = scmp.eq.s32.totalorder %s38, 0
      %p248 = por %p246, %p247
      %s250 = sadd.s32 %s249, 1
      %p253 = scmp.eq.s32.totalorder %s32, 1
      %p254 = scmp.ne.s32.totalorder %s249, %s251
      %p255 = scmp.eq.s32.totalorder %s32, 0
      %p256 = por %p254, %p255
      %p257 = scmp.ne.s32.totalorder %s249, %s251
      %p258 = scmp.eq.s32.totalorder %s37, 1
      %p259 = por %p257, %p258
      %p260 = scmp.ne.s32.totalorder %s251, %s252
      %p261 = scmp.eq.s32.totalorder %s37, 0
      %p262 = por %p260, %p261
      %p263 = scmp.ne.s32.totalorder %s251, %s252
      %p264 = scmp.eq.s32.totalorder %s38, 1
      %p265 = por %p263, %p264
      %p267 = scmp.ne.s32.totalorder %s252, %s266
      %p268 = scmp.eq.s32.totalorder %s38, 0
      %p269 = por %p267, %p268
      %s271 = sadd.s32 %s270, 1
      %p274 = scmp.eq.s32.totalorder %s32, 1
      %p275 = scmp.ne.s32.totalorder %s270, %s272
      %p276 = scmp.eq.s32.totalorder %s32, 0
      %p277 = por %p275, %p276
      %p278 = scmp.ne.s32.totalorder %s270, %s272
      %p279 = scmp.eq.s32.totalorder %s37, 1
      %p280 = por %p278, %p279
      %p281 = scmp.ne.s32.totalorder %s272, %s273
      %p282 = scmp.eq.s32.totalorder %s37, 0
      %p283 = por %p281, %p282
      %p284 = scmp.ne.s32.totalorder %s272, %s273
      %p285 = scmp.eq.s32.totalorder %s38, 1
      %p286 = por %p284, %p285
      %p288 = scmp.ne.s32.totalorder %s273, %s287
      %p289 = scmp.eq.s32.totalorder %s38, 0
      %p290 = por %p288, %p289
      %s292 = sadd.s32 %s291, 1
      %p295 = scmp.eq.s32.totalorder %s32, 1
      %p296 = scmp.ne.s32.totalorder %s291, %s293
      %p297 = scmp.eq.s32.totalorder %s32, 0
      %p298 = por %p296, %p297
      %p299 = scmp.ne.s32.totalorder %s291, %s293
      %p300 = scmp.eq.s32.totalorder %s37, 1
      %p301 = por %p299, %p300
      %p302 = scmp.ne.s32.totalorder %s293, %s294
      %p303 = scmp.eq.s32.totalorder %s37, 0
      %p304 = por %p302, %p303
      %p305 = scmp.ne.s32.totalorder %s293, %s294
      %p306 = scmp.eq.s32.totalorder %s38, 1
      %p307 = por %p305, %p306
      %p309 = scmp.ne.s32.totalorder %s294, %s308
      %p310 = scmp.eq.s32.totalorder %s38, 0
      %p311 = por %p309, %p310
      %s313 = sadd.s32 %s312, 1
      %p316 = scmp.eq.s32.totalorder %s32, 1
      %p317 = scmp.ne.s32.totalorder %s312, %s314
      %p318 = scmp.eq.s32.totalorder %s32, 0
      %p319 = por %p317, %p318
      %p320 = scmp.ne.s32.totalorder %s312, %s314
      %p321 = scmp.eq.s32.totalorder %s37, 1
      %p322 = por %p320, %p321
      %p323 = scmp.ne.s32.totalorder %s314, %s315
      %p324 = scmp.eq.s32.totalorder %s37, 0
      %p325 = por %p323, %p324
      %p326 = scmp.ne.s32.totalorder %s314, %s315
      %p327 = scmp.eq.s32.totalorder %s38, 1
      %p328 = por %p326, %p327
      %p330 = scmp.ne.s32.totalorder %s315, %s329
      %p331 = scmp.eq.s32.totalorder %s38, 0
      %p332 = por %p330, %p331
      %s333 = ssub.s32 %s39, %s51
      %s334 = ssub.s32 %s40, %s47
      %s335 = sor.u32 %s333, %s334
      %p336 = scmp.eq.s32.totalorder %s335, 0
      %s338 = sadd.s32 %s337, 1
      %s339 = scalar_select %p336, %s337, %s338
      %p342 = pneg %p336
      %p343 = scmp.eq.s32.totalorder %s32, 1
      %p344 = por %p342, %p343
      %p345 = scmp.ne.s32.totalorder %s337, %s340
      %p346 = scmp.eq.s32.totalorder %s32, 0
      %p347 = por %p345, %p346
      %p348 = scmp.ne.s32.totalorder %s337, %s340
      %p349 = scmp.eq.s32.totalorder %s37, 1
      %p350 = por %p348, %p349
      %p351 = scmp.ne.s32.totalorder %s340, %s341
      %p352 = scmp.eq.s32.totalorder %s37, 0
      %p353 = por %p351, %p352
      %p354 = scmp.ne.s32.totalorder %s340, %s341
      %p355 = scmp.eq.s32.totalorder %s38, 1
      %p356 = por %p354, %p355
      %p358 = scmp.ne.s32.totalorder %s341, %s357
      %p359 = scmp.eq.s32.totalorder %s38, 0
      %p360 = por %p358, %p359
      %p361 = scmp.le.s32.totalorder 1, %s32
      %p362 = scmp.lt.s32.totalorder %s32, 3
      %p363 = pnand %p361, %p362
      %p364 = pneg %p363
      // Predicated region
      $region9: #{tpu_custom_call.1} parent=5 // pred_check
        _
      $region10: #{tpu_custom_call.1} parent=5 // pred_check_branch
        %366 = sbr.rel (%p363) target = $region12
      $region11: #{tpu_custom_call.1} parent=5 // pred_region
        %s367 = ssub.s32 %s32, 1
        // Predicated region
        $region13: #{tpu_custom_call.1} parent=11 // pred_check
          %p368 = pneg %p178
        $region14: #{tpu_custom_call.1} parent=11 // pred_check_branch
          %370 = sbr.rel (%p368) target = $region16
        $region15: #{tpu_custom_call.1} parent=11 // pred_region
          %p371 = scmp.lt.s32.totalorder %s42, 0
          %s372 = scalar_select %p371, %s42, 0
          %s373 = smul.addr %s372, 8
          %s374 = scalar_lea.vmem %s4, %s373
        $region16: #{tpu_custom_call.1} parent=11 // pred_fallthru
          _
        // Predicated region
        $region17: #{tpu_custom_call.1} parent=11 // pred_check
          %p375 = pneg %p199
        $region18: #{tpu_custom_call.1} parent=11 // pred_check_branch
          %377 = sbr.rel (%p375) target = $region20
        $region19: #{tpu_custom_call.1} parent=11 // pred_region
          %s379 = ssub.s32 1024, 1024
          %380 = vsyncadd [#allocation9], %s379
          %s381 = sshll.u32 [#allocation10], 4
          %s382 = int_to_ptr.vmem [resolvable:$true] %s381
          %387 = dma.hbm_to_vmem [thread:$0]  %s5, 1024, %s382, [#allocation9], 128, 128, 8
        $region20: #{tpu_custom_call.1} parent=11 // pred_fallthru
          _
        // Predicated region
        $region21: #{tpu_custom_call.1} parent=11 // pred_check
          %p388 = pneg %p220
        $region22: #{tpu_custom_call.1} parent=11 // pred_check_branch
          %390 = sbr.rel (%p388) target = $region24
        $region23: #{tpu_custom_call.1} parent=11 // pred_region
          %s392 = ssub.s32 1024, 1024
          %393 = vsyncadd [#allocation12], %s392
          %s394 = sshll.u32 [#allocation11], 4
          %s395 = int_to_ptr.vmem [resolvable:$true] %s394
          %400 = dma.hbm_to_vmem [thread:$0]  %s6, 1024, %s395, [#allocation12], 128, 128, 8
        $region24: #{tpu_custom_call.1} parent=11 // pred_fallthru
          _
        // Predicated region
        $region25: #{tpu_custom_call.1} parent=11 // pred_check
          %p401 = pneg %p241
        $region26: #{tpu_custom_call.1} parent=11 // pred_check_branch
          %403 = sbr.rel (%p401) target = $region28
        $region27: #{tpu_custom_call.1} parent=11 // pred_region
          %s405 = ssub.s32 1024, 1024
          %406 = vsyncadd [#allocation12], %s405
          %s407 = sshll.u32 [#allocation13], 4
          %s408 = int_to_ptr.vmem [resolvable:$true] %s407
          %413 = dma.hbm_to_vmem [thread:$0]  %s7, 1024, %s408, [#allocation12], 128, 128, 8
        $region28: #{tpu_custom_call.1} parent=11 // pred_fallthru
          _
        // Predicated region
        $region29: #{tpu_custom_call.1} parent=11 // pred_check
          %p414 = pneg %p262
        $region30: #{tpu_custom_call.1} parent=11 // pred_check_branch
          %416 = sbr.rel (%p414) target = $region32
        $region31: #{tpu_custom_call.1} parent=11 // pred_region
          %s418 = ssub.s32 1024, 1024
          %419 = vsyncadd [#allocation15], %s418
          %s420 = sshll.u32 [#allocation14], 4
          %s421 = int_to_ptr.vmem [resolvable:$true] %s420
          %426 = dma.hbm_to_vmem [thread:$0]  %s8, 1024, %s421, [#allocation15], 128, 128, 8
        $region32: #{tpu_custom_call.1} parent=11 // pred_fallthru
          _
        // Predicated region
        $region33: #{tpu_custom_call.1} parent=11 // pred_check
          %p427 = pneg %p283
        $region34: #{tpu_custom_call.1} parent=11 // pred_check_branch
          %429 = sbr.rel (%p427) target = $region36
        $region35: #{tpu_custom_call.1} parent=11 // pred_region
          _
        $region36: #{tpu_custom_call.1} parent=11 // pred_fallthru
          _
        // Predicated region
        $region37: #{tpu_custom_call.1} parent=11 // pred_check
          %p430 = pneg %p304
        $region38: #{tpu_custom_call.1} parent=11 // pred_check_branch
          %432 = sbr.rel (%p430) target = $region40
        $region39: #{tpu_custom_call.1} parent=11 // pred_region
          _
        $region40: #{tpu_custom_call.1} parent=11 // pred_fallthru
          _
        // Predicated region
        $region41: #{tpu_custom_call.1} parent=11 // pred_check
          %p433 = pneg %p325
        $region42: #{tpu_custom_call.1} parent=11 // pred_check_branch
          %435 = sbr.rel (%p433) target = $region44
        $region43: #{tpu_custom_call.1} parent=11 // pred_region
          _
        $region44: #{tpu_custom_call.1} parent=11 // pred_fallthru
          _
      $region12: #{tpu_custom_call.1} parent=5 // pred_fallthru
        _
      %p436 = scmp.lt.s32.totalorder %s32, 2
      // Predicated region
      $region45: #{tpu_custom_call.1} parent=5 // pred_check
        %p437 = pneg %p436
      $region46: #{tpu_custom_call.1} parent=5 // pred_check_branch
        %439 = sbr.rel (%p437) target = $region48
      $region47: #{tpu_custom_call.1} parent=5 // pred_region
        // Predicated region
        $region49: #{tpu_custom_call.1} parent=47 // pred_check
          %p440 = pneg %p66
        $region50: #{tpu_custom_call.1} parent=47 // pred_check_branch
          %442 = sbr.rel (%p440) target = $region52
        $region51: #{tpu_custom_call.1} parent=47 // pred_region
          %s443 = sand.u32 %s56, 1
          %s444 = scalar_lea.sflag [#allocation3], %s443
          %s445 = sand.u32 %s56, 1
          %s446 = smul.addr %s445, 8
          %s447 = scalar_lea.vmem [#allocation2], %s446
          %s449 = ssub.s32 128, 128
          %450 = vsyncadd %s444, %s449
          %s451 = sadd.s32 %s40, %s39
          %s452 = smul.addr %s451, 128
          %s453 = scalar_lea.hbm %s0, %s452
          %s455 = sshll.u32 %s447, 4
          %s456 = int_to_ptr.vmem [resolvable:$true] %s455
          %458 = dma.hbm_to_vmem [thread:$0]  %s453, 128, %s456, %s444
        $region52: #{tpu_custom_call.1} parent=47 // pred_fallthru
          _
        // Predicated region
        $region53: #{tpu_custom_call.1} parent=47 // pred_check
          %p459 = pneg %p92
        $region54: #{tpu_custom_call.1} parent=47 // pred_check_branch
          %461 = sbr.rel (%p459) target = $region56
        $region55: #{tpu_custom_call.1} parent=47 // pred_region
          %s462 = sand.u32 %s32, 1
          %s463 = scalar_lea.sflag [#allocation6], %s462
          %s464 = sand.u32 %s82, 1
          %s465 = smul.addr %s464, 8
          %s466 = scalar_lea.vmem [#allocation5], %s465
          %s468 = ssub.s32 128, 128
          %469 = vsyncadd %s463, %s468
          %s470 = smul.addr %s39, 128
          %s471 = scalar_lea.hbm %s1, %s470
          %s473 = sshll.u32 %s466, 4
          %s474 = int_to_ptr.vmem [resolvable:$true] %s473
          %476 = dma.hbm_to_vmem [thread:$0]  %s471, 128, %s474, %s463
        $region56: #{tpu_custom_call.1} parent=47 // pred_fallthru
          _
        // Predicated region
        $region57: #{tpu_custom_call.1} parent=47 // pred_check
          %p477 = pneg %p118
        $region58: #{tpu_custom_call.1} parent=47 // pred_check_branch
          %479 = sbr.rel (%p477) target = $region60
        $region59: #{tpu_custom_call.1} parent=47 // pred_region
          %s480 = sand.u32 %s32, 1
          %s481 = scalar_lea.sflag [#allocation6], %s480
          %s482 = sand.u32 %s108, 1
          %s483 = smul.addr %s482, 8
          %s484 = scalar_lea.vmem [#allocation7], %s483
          %s486 = ssub.s32 128, 128
          %487 = vsyncadd %s481, %s486
          %s488 = smul.addr %s39, 128
          %s489 = scalar_lea.hbm %s2, %s488
          %s491 = sshll.u32 %s484, 4
          %s492 = int_to_ptr.vmem [resolvable:$true] %s491
          %494 = dma.hbm_to_vmem [thread:$0]  %s489, 128, %s492, %s481
        $region60: #{tpu_custom_call.1} parent=47 // pred_fallthru
          _
        // Predicated region
        $region61: #{tpu_custom_call.1} parent=47 // pred_check
          %p495 = pneg %p146
        $region62: #{tpu_custom_call.1} parent=47 // pred_check_branch
          %497 = sbr.rel (%p495) target = $region64
        $region63: #{tpu_custom_call.1} parent=47 // pred_region
          %s498 = sand.u32 %s32, 1
          %s499 = scalar_lea.sflag [#allocation9], %s498
          %s500 = sand.u32 %s136, 1
          %s501 = smul.addr %s500, 8
          %s502 = scalar_lea.vmem [#allocation8], %s501
          %s504 = ssub.s32 128, 128
          %505 = vsyncadd %s499, %s504
          %s506 = sadd.s32 %s40, %s39
          %s507 = smul.addr %s506, 128
          %s508 = scalar_lea.hbm %s3, %s507
          %s510 = sshll.u32 %s502, 4
          %s511 = int_to_ptr.vmem [resolvable:$true] %s510
          %513 = dma.hbm_to_vmem [thread:$0]  %s508, 128, %s511, %s499
        $region64: #{tpu_custom_call.1} parent=47 // pred_fallthru
          _
      $region48: #{tpu_custom_call.1} parent=5 // pred_fallthru
        _
      %p514 = scmp.le.s32.totalorder 1, %s32
      %p515 = scmp.lt.s32.totalorder %s32, 3
      %p516 = pnand %p514, %p515
      %p517 = pneg %p516
      // Predicated region
      $region65: #{tpu_custom_call.1} parent=5 // pred_check
        _
      $region66: #{tpu_custom_call.1} parent=5 // pred_check_branch
        %519 = sbr.rel (%p516) target = $region68
      $region67: #{tpu_custom_call.1} parent=5 // pred_region
        %s520 = ssub.s32 %s32, 1
        %s521 = sand.u32 %s59, 1
        %s522 = scalar_lea.sflag [#allocation3], %s521
        %s523 = sand.u32 %s59, 1
        %s524 = smul.addr %s523, 8
        %s525 = scalar_lea.vmem [#allocation2], %s524
        // Predicated region
        $region69: #{tpu_custom_call.1} parent=67 // pred_check
          %p526 = pneg %p72
        $region70: #{tpu_custom_call.1} parent=67 // pred_check_branch
          %528 = sbr.rel (%p526) target = $region72
        $region71: #{tpu_custom_call.1} parent=67 // pred_region
          %529 = dma.done %s522, 128
        $region72: #{tpu_custom_call.1} parent=67 // pred_fallthru
          _
        %s530 = sand.u32 %s37, 1
        %s531 = scalar_lea.sflag [#allocation6], %s530
        %s532 = sand.u32 %s85, 1
        %s533 = smul.addr %s532, 8
        %s534 = scalar_lea.vmem [#allocation5], %s533
        // Predicated region
        $region73: #{tpu_custom_call.1} parent=67 // pred_check
          %p535 = pneg %p98
        $region74: #{tpu_custom_call.1} parent=67 // pred_check_branch
          %537 = sbr.rel (%p535) target = $region76
        $region75: #{tpu_custom_call.1} parent=67 // pred_region
          %538 = dma.done %s531, 128
        $region76: #{tpu_custom_call.1} parent=67 // pred_fallthru
          _
        %s539 = sand.u32 %s37, 1
        %s540 = scalar_lea.sflag [#allocation6], %s539
        %s541 = sand.u32 %s111, 1
        %s542 = smul.addr %s541, 8
        %s543 = scalar_lea.vmem [#allocation7], %s542
        // Predicated region
        $region77: #{tpu_custom_call.1} parent=67 // pred_check
          %p544 = pneg %p124
        $region78: #{tpu_custom_call.1} parent=67 // pred_check_branch
          %546 = sbr.rel (%p544) target = $region80
        $region79: #{tpu_custom_call.1} parent=67 // pred_region
          %547 = dma.done %s540, 128
        $region80: #{tpu_custom_call.1} parent=67 // pred_fallthru
          _
        %s548 = sand.u32 %s37, 1
        %s549 = scalar_lea.sflag [#allocation9], %s548
        %s550 = sand.u32 %s139, 1
        %s551 = smul.addr %s550, 8
        %s552 = scalar_lea.vmem [#allocation8], %s551
        // Predicated region
        $region81: #{tpu_custom_call.1} parent=67 // pred_check
          %p553 = pneg %p152
        $region82: #{tpu_custom_call.1} parent=67 // pred_check_branch
          %555 = sbr.rel (%p553) target = $region84
        $region83: #{tpu_custom_call.1} parent=67 // pred_region
          %556 = dma.done %s549, 128
        $region84: #{tpu_custom_call.1} parent=67 // pred_fallthru
          _
        // Predicated region
        $region85: #{tpu_custom_call.1} parent=67 // pred_check
          %p557 = pneg %p199
        $region86: #{tpu_custom_call.1} parent=67 // pred_check_branch
          %559 = sbr.rel (%p557) target = $region88
        $region87: #{tpu_custom_call.1} parent=67 // pred_region
          %560 = dma.done [#allocation9], 1024
        $region88: #{tpu_custom_call.1} parent=67 // pred_fallthru
          _
        // Predicated region
        $region89: #{tpu_custom_call.1} parent=67 // pred_check
          %p561 = pneg %p220
        $region90: #{tpu_custom_call.1} parent=67 // pred_check_branch
          %563 = sbr.rel (%p561) target = $region92
        $region91: #{tpu_custom_call.1} parent=67 // pred_region
          %564 = dma.done [#allocation12], 1024
        $region92: #{tpu_custom_call.1} parent=67 // pred_fallthru
          _
        // Predicated region
        $region93: #{tpu_custom_call.1} parent=67 // pred_check
          %p565 = pneg %p241
        $region94: #{tpu_custom_call.1} parent=67 // pred_check_branch
          %567 = sbr.rel (%p565) target = $region96
        $region95: #{tpu_custom_call.1} parent=67 // pred_region
          %568 = dma.done [#allocation12], 1024
        $region96: #{tpu_custom_call.1} parent=67 // pred_fallthru
          _
        // Predicated region
        $region97: #{tpu_custom_call.1} parent=67 // pred_check
          %p569 = pneg %p262
        $region98: #{tpu_custom_call.1} parent=67 // pred_check_branch
          %571 = sbr.rel (%p569) target = $region100
        $region99: #{tpu_custom_call.1} parent=67 // pred_region
          %572 = dma.done [#allocation15], 1024
        $region100: #{tpu_custom_call.1} parent=67 // pred_fallthru
          _
        %s573 = sand.u32 %s59, 1
        %s574 = scalar_lea.sflag [#allocation3], %s573
        %s575 = sand.u32 %s59, 1
        %s576 = smul.addr %s575, 8
        %s577 = scalar_lea.vmem [#allocation2], %s576
        %p578 = pneg %p72
        %p579 = pneg %p69
        %s580 = sand.u32 %s37, 1
        %s581 = scalar_lea.sflag [#allocation6], %s580
        %s582 = sand.u32 %s85, 1
        %s583 = smul.addr %s582, 8
        %s584 = scalar_lea.vmem [#allocation5], %s583
        %p585 = pneg %p98
        %p586 = pneg %p95
        %s587 = sand.u32 %s37, 1
        %s588 = scalar_lea.sflag [#allocation6], %s587
        %s589 = sand.u32 %s111, 1
        %s590 = smul.addr %s589, 8
        %s591 = scalar_lea.vmem [#allocation7], %s590
        %p592 = pneg %p124
        %p593 = pneg %p121
        %s594 = sand.u32 %s37, 1
        %s595 = scalar_lea.sflag [#allocation9], %s594
        %s596 = sand.u32 %s139, 1
        %s597 = smul.addr %s596, 8
        %s598 = scalar_lea.vmem [#allocation8], %s597
        %p599 = pneg %p152
        %p600 = pneg %p149
        %p601 = scmp.lt.s32.totalorder %s42, 0
        %s602 = scalar_select %p601, %s42, 0
        %s603 = smul.addr %s602, 8
        %s604 = scalar_lea.vmem %s4, %s603
        %p605 = pneg %p178
        %p606 = pneg %p175
        %p607 = pneg %p199
        %p608 = pneg %p196
        %p609 = pneg %p220
        %p610 = pneg %p217
        %p611 = pneg %p241
        %p612 = pneg %p238
        %p613 = pneg %p262
        %p614 = pneg %p259
        %p615 = pneg %p283
        %p616 = pneg %p280
        %p617 = pneg %p304
        %p618 = pneg %p301
        %p619 = pneg %p325
        %p620 = pneg %p322
        %p621 = pneg %p353
        %p622 = pneg %p350
        %s623 = sand.u32 %s340, 1
        %s624 = scalar_lea.sflag [#allocation4], %s623
        %s625 = sand.u32 %s340, 1
        %s626 = smul.addr %s625, 8
        %s627 = scalar_lea.vmem [#allocation16], %s626
        %p628 = scmp.lt.s32.totalorder %s42, 0
        %s629 = scalar_select %p628, %s42, 0
        %s630 = smul.addr %s629, 8
        %s631 = scalar_lea.vmem %s4, %s630
        %v632 = vld [vmem:[%s525] sm:$0xff]
        %v633 = vld [vmem:[%s534] sm:$0xff]
        %v634 = vld [vmem:[%s543] sm:$0xff]
        %v635 = vld [vmem:[#allocation10] sm:$0xff]
        %v636 = vld [vmem:[#allocation10 + $0x8] sm:$0xff]
        %v637 = vld [vmem:[#allocation10 + $0x10] sm:$0xff]
        %v638 = vld [vmem:[#allocation10 + $0x18] sm:$0xff]
        %v639 = vld [vmem:[#allocation10 + $0x20] sm:$0xff]
        %v640 = vld [vmem:[#allocation10 + $0x28] sm:$0xff]
        %v641 = vld [vmem:[#allocation10 + $0x30] sm:$0xff]
        %v642 = vld [vmem:[#allocation10 + $0x38] sm:$0xff]
        %vm643 = vcmask 523264
        %v645 = vsel %vm643, %v632, 0
        %647 = vmatprep.subr.mxu0 0.0
        %648 = vmatpush1.msra.mxu0 %v635
        %649 = vmatprep.subr.mxu0 0.0
        %650 = vmatpush1.msra.mxu0 %v636
        %651 = vmatprep.subr.mxu0 0.0
        %652 = vmatpush1.msra.mxu0 %v637
        %653 = vmatprep.subr.mxu0 0.0
        %654 = vmatpush1.msra.mxu0 %v638
        %655 = vmatprep.subr.mxu0 0.0
        %656 = vmatpush1.msra.mxu0 %v639
        %657 = vmatprep.subr.mxu0 0.0
        %658 = vmatpush1.msra.mxu0 %v640
        %659 = vmatprep.subr.mxu0 0.0
        %660 = vmatpush1.msra.mxu0 %v641
        %661 = vmatprep.subr.mxu0 0.0
        %662 = vmatpush1.msra.mxu0 %v642
        %663 = vmatprep.subr.mxu0 0.0
        %664 = vmatpush1.msra.mxu0 0.0
        %665 = vmatprep.subr.mxu0 0.0
        %666 = vmatpush1.msra.mxu0 0.0
        %667 = vmatprep.subr.mxu0 0.0
        %668 = vmatpush1.msra.mxu0 0.0
        %669 = vmatprep.subr.mxu0 0.0
        %670 = vmatpush1.msra.mxu0 0.0
        %671 = vmatprep.subr.mxu0 0.0
        %672 = vmatpush1.msra.mxu0 0.0
        %673 = vmatprep.subr.mxu0 0.0
        %674 = vmatpush1.msra.mxu0 0.0
        %675 = vmatprep.subr.mxu0 0.0
        %676 = vmatpush1.msra.mxu0 0.0
        %677 = vmatprep.subr.mxu0 0.0
        %678 = vmatpush1.msra.mxu0 0.0
        %679 = vmatprep.subr.mxu0 0.0
        %680 = vmatpush1.msra.mxu0 0.0
        %681 = vmatprep.subr.mxu0 0.0
        %682 = vmatpush1.msra.mxu0 0.0
        %683 = vmatprep.subr.mxu0 0.0
        %684 = vmatpush1.msra.mxu0 0.0
        %685 = vmatprep.subr.mxu0 0.0
        %686 = vmatpush1.msra.mxu0 0.0
        %687 = vmatprep.subr.mxu0 0.0
        %688 = vmatpush1.msra.mxu0 0.0
        %689 = vmatprep.subr.mxu0 0.0
        %690 = vmatpush1.msra.mxu0 0.0
        %691 = vmatprep.subr.mxu0 0.0
        %692 = vmatpush1.msra.mxu0 0.0
        %693 = vmatprep.subr.mxu0 0.0
        %694 = vmatpush1.msra.mxu0 0.0
        %695 = vmatprep.subr.mxu0 0.0
        %696 = vmatpush1.msra.mxu0 0.0
        %697 = vmatprep.subr.mxu0 0.0
        %698 = vmatpush1.msra.mxu0 0.0
        %699 = vmatprep.subr.mxu0 0.0
        %700 = vmatpush1.msra.mxu0 0.0
        %701 = vmatprep.subr.mxu0 0.0
        %702 = vmatpush1.msra.mxu0 0.0
        %703 = vmatprep.subr.mxu0 0.0
        %704 = vmatpush1.msra.mxu0 0.0
        %705 = vmatprep.subr.mxu0 0.0
        %706 = vmatpush1.msra.mxu0 0.0
        %707 = vmatprep.subr.mxu0 0.0
        %708 = vmatpush1.msra.mxu0 0.0
        %709 = vmatprep.subr.mxu0 0.0
        %710 = vmatpush1.msra.mxu0 0.0
        %711 = vmatprep.mubr.f32.mxu0 0.0
        %712 = vmatmul.mubr.f32.gmra.mrb[0].mxu0 %v645
        %v713 = vpop.f32.mrb[0].mxu0
        %v714 = vadd.f32 0.0, %v713
        %v715 = vpop.f32.mrb[0].mxu0
        %716 = vdwg.mxu0
        %v717 = vld [vmem:[#allocation11] sm:$0xff]
        %v718 = vld [vmem:[#allocation11 + $0x8] sm:$0xff]
        %v719 = vld [vmem:[#allocation11 + $0x10] sm:$0xff]
        %v720 = vld [vmem:[#allocation11 + $0x18] sm:$0xff]
        %v721 = vld [vmem:[#allocation11 + $0x20] sm:$0xff]
        %v722 = vld [vmem:[#allocation11 + $0x28] sm:$0xff]
        %v723 = vld [vmem:[#allocation11 + $0x30] sm:$0xff]
        %v724 = vld [vmem:[#allocation11 + $0x38] sm:$0xff]
        %v726 = vsel %vm643, %v633, 0
        %728 = vmatprep.subr.mxu0 0.0
        %729 = vmatpush1.msra.mxu0 %v717
        %730 = vmatprep.subr.mxu0 0.0
        %731 = vmatpush1.msra.mxu0 %v718
        %732 = vmatprep.subr.mxu0 0.0
        %733 = vmatpush1.msra.mxu0 %v719
        %734 = vmatprep.subr.mxu0 0.0
        %735 = vmatpush1.msra.mxu0 %v720
        %736 = vmatprep.subr.mxu0 0.0
        %737 = vmatpush1.msra.mxu0 %v721
        %738 = vmatprep.subr.mxu0 0.0
        %739 = vmatpush1.msra.mxu0 %v722
        %740 = vmatprep.subr.mxu0 0.0
        %741 = vmatpush1.msra.mxu0 %v723
        %742 = vmatprep.subr.mxu0 0.0
        %743 = vmatpush1.msra.mxu0 %v724
        %744 = vmatprep.subr.mxu0 0.0
        %745 = vmatpush1.msra.mxu0 0.0
        %746 = vmatprep.subr.mxu0 0.0
        %747 = vmatpush1.msra.mxu0 0.0
        %748 = vmatprep.subr.mxu0 0.0
        %749 = vmatpush1.msra.mxu0 0.0
        %750 = vmatprep.subr.mxu0 0.0
        %751 = vmatpush1.msra.mxu0 0.0
        %752 = vmatprep.subr.mxu0 0.0
        %753 = vmatpush1.msra.mxu0 0.0
        %754 = vmatprep.subr.mxu0 0.0
        %755 = vmatpush1.msra.mxu0 0.0
        %756 = vmatprep.subr.mxu0 0.0
        %757 = vmatpush1.msra.mxu0 0.0
        %758 = vmatprep.subr.mxu0 0.0
        %759 = vmatpush1.msra.mxu0 0.0
        %760 = vmatprep.subr.mxu0 0.0
        %761 = vmatpush1.msra.mxu0 0.0
        %762 = vmatprep.subr.mxu0 0.0
        %763 = vmatpush1.msra.mxu0 0.0
        %764 = vmatprep.subr.mxu0 0.0
        %765 = vmatpush1.msra.mxu0 0.0
        %766 = vmatprep.subr.mxu0 0.0
        %767 = vmatpush1.msra.mxu0 0.0
        %768 = vmatprep.subr.mxu0 0.0
        %769 = vmatpush1.msra.mxu0 0.0
        %770 = vmatprep.subr.mxu0 0.0
        %771 = vmatpush1.msra.mxu0 0.0
        %772 = vmatprep.subr.mxu0 0.0
        %773 = vmatpush1.msra.mxu0 0.0
        %774 = vmatprep.subr.mxu0 0.0
        %775 = vmatpush1.msra.mxu0 0.0
        %776 = vmatprep.subr.mxu0 0.0
        %777 = vmatpush1.msra.mxu0 0.0
        %778 = vmatprep.subr.mxu0 0.0
        %779 = vmatpush1.msra.mxu0 0.0
        %780 = vmatprep.subr.mxu0 0.0
        %781 = vmatpush1.msra.mxu0 0.0
        %782 = vmatprep.subr.mxu0 0.0
        %783 = vmatpush1.msra.mxu0 0.0
        %784 = vmatprep.subr.mxu0 0.0
        %785 = vmatpush1.msra.mxu0 0.0
        %786 = vmatprep.subr.mxu0 0.0
        %787 = vmatpush1.msra.mxu0 0.0
        %788 = vmatprep.subr.mxu0 0.0
        %789 = vmatpush1.msra.mxu0 0.0
        %790 = vmatprep.subr.mxu0 0.0
        %791 = vmatpush1.msra.mxu0 0.0
        %792 = vmatprep.mubr.f32.mxu0 0.0
        %793 = vmatmul.mubr.f32.gmra.mrb[0].mxu0 %v726
        %v794 = vpop.f32.mrb[0].mxu0
        %v795 = vadd.f32 0.0, %v794
        %v796 = vpop.f32.mrb[0].mxu0
        %797 = vdwg.mxu0
        %v798 = vld [vmem:[#allocation13] sm:$0xff]
        %v799 = vld [vmem:[#allocation13 + $0x8] sm:$0xff]
        %v800 = vld [vmem:[#allocation13 + $0x10] sm:$0xff]
        %v801 = vld [vmem:[#allocation13 + $0x18] sm:$0xff]
        %v802 = vld [vmem:[#allocation13 + $0x20] sm:$0xff]
        %v803 = vld [vmem:[#allocation13 + $0x28] sm:$0xff]
        %v804 = vld [vmem:[#allocation13 + $0x30] sm:$0xff]
        %v805 = vld [vmem:[#allocation13 + $0x38] sm:$0xff]
        %v807 = vsel %vm643, %v634, 0
        %809 = vmatprep.subr.mxu0 0.0
        %810 = vmatpush1.msra.mxu0 %v798
        %811 = vmatprep.subr.mxu0 0.0
        %812 = vmatpush1.msra.mxu0 %v799
        %813 = vmatprep.subr.mxu0 0.0
        %814 = vmatpush1.msra.mxu0 %v800
        %815 = vmatprep.subr.mxu0 0.0
        %816 = vmatpush1.msra.mxu0 %v801
        %817 = vmatprep.subr.mxu0 0.0
        %818 = vmatpush1.msra.mxu0 %v802
        %819 = vmatprep.subr.mxu0 0.0
        %820 = vmatpush1.msra.mxu0 %v803
        %821 = vmatprep.subr.mxu0 0.0
        %822 = vmatpush1.msra.mxu0 %v804
        %823 = vmatprep.subr.mxu0 0.0
        %824 = vmatpush1.msra.mxu0 %v805
        %825 = vmatprep.subr.mxu0 0.0
        %826 = vmatpush1.msra.mxu0 0.0
        %827 = vmatprep.subr.mxu0 0.0
        %828 = vmatpush1.msra.mxu0 0.0
        %829 = vmatprep.subr.mxu0 0.0
        %830 = vmatpush1.msra.mxu0 0.0
        %831 = vmatprep.subr.mxu0 0.0
        %832 = vmatpush1.msra.mxu0 0.0
        %833 = vmatprep.subr.mxu0 0.0
        %834 = vmatpush1.msra.mxu0 0.0
        %835 = vmatprep.subr.mxu0 0.0
        %836 = vmatpush1.msra.mxu0 0.0
        %837 = vmatprep.subr.mxu0 0.0
        %838 = vmatpush1.msra.mxu0 0.0
        %839 = vmatprep.subr.mxu0 0.0
        %840 = vmatpush1.msra.mxu0 0.0
        %841 = vmatprep.subr.mxu0 0.0
        %842 = vmatpush1.msra.mxu0 0.0
        %843 = vmatprep.subr.mxu0 0.0
        %844 = vmatpush1.msra.mxu0 0.0
        %845 = vmatprep.subr.mxu0 0.0
        %846 = vmatpush1.msra.mxu0 0.0
        %847 = vmatprep.subr.mxu0 0.0
        %848 = vmatpush1.msra.mxu0 0.0
        %849 = vmatprep.subr.mxu0 0.0
        %850 = vmatpush1.msra.mxu0 0.0
        %851 = vmatprep.subr.mxu0 0.0
        %852 = vmatpush1.msra.mxu0 0.0
        %853 = vmatprep.subr.mxu0 0.0
        %854 = vmatpush1.msra.mxu0 0.0
        %855 = vmatprep.subr.mxu0 0.0
        %856 = vmatpush1.msra.mxu0 0.0
        %857 = vmatprep.subr.mxu0 0.0
        %858 = vmatpush1.msra.mxu0 0.0
        %859 = vmatprep.subr.mxu0 0.0
        %860 = vmatpush1.msra.mxu0 0.0
        %861 = vmatprep.subr.mxu0 0.0
        %862 = vmatpush1.msra.mxu0 0.0
        %863 = vmatprep.subr.mxu0 0.0
        %864 = vmatpush1.msra.mxu0 0.0
        %865 = vmatprep.subr.mxu0 0.0
        %866 = vmatpush1.msra.mxu0 0.0
        %867 = vmatprep.subr.mxu0 0.0
        %868 = vmatpush1.msra.mxu0 0.0
        %869 = vmatprep.subr.mxu0 0.0
        %870 = vmatpush1.msra.mxu0 0.0
        %871 = vmatprep.subr.mxu0 0.0
        %872 = vmatpush1.msra.mxu0 0.0
        %873 = vmatprep.mubr.f32.mxu0 0.0
        %874 = vmatmul.mubr.f32.gmra.mrb[0].mxu0 %v807
        %v875 = vpop.f32.mrb[0].mxu0
        %v876 = vadd.f32 0.0, %v875
        %v877 = vpop.f32.mrb[0].mxu0
        %878 = vdwg.mxu0
        %v879 = vld [vmem:[%s631] sm:$0xff]
        %vm880 = vcmp.eq.s32.totalorder %v879, 0
        %vm881 = vcmask 64512
        %v883 = vsel %vm881, %v714, 0
        %v886 = vsel %vm881, %v795, 0
        %888 = vmatprep.subr.mxu0 0.0
        %889 = vmatpush1.xpose.msra.mxu0 %v886
        %890 = vmatprep.subr.mxu0 0.0
        %891 = vmatpush1.xpose.msra.mxu0 0.0
        %892 = vmatprep.subr.mxu0 0.0
        %893 = vmatpush1.xpose.msra.mxu0 0.0
        %894 = vmatprep.subr.mxu0 0.0
        %895 = vmatpush1.xpose.msra.mxu0 0.0
        %896 = vmatprep.subr.mxu0 0.0
        %897 = vmatpush1.xpose.msra.mxu0 0.0
        %898 = vmatprep.subr.mxu0 0.0
        %899 = vmatpush1.xpose.msra.mxu0 0.0
        %900 = vmatprep.subr.mxu0 0.0
        %901 = vmatpush1.xpose.msra.mxu0 0.0
        %902 = vmatprep.subr.mxu0 0.0
        %903 = vmatpush1.xpose.msra.mxu0 0.0
        %904 = vmatprep.subr.mxu0 0.0
        %905 = vmatpush1.xpose.msra.mxu0 0.0
        %906 = vmatprep.subr.mxu0 0.0
        %907 = vmatpush1.xpose.msra.mxu0 0.0
        %908 = vmatprep.subr.mxu0 0.0
        %909 = vmatpush1.xpose.msra.mxu0 0.0
        %910 = vmatprep.subr.mxu0 0.0
        %911 = vmatpush1.xpose.msra.mxu0 0.0
        %912 = vmatprep.subr.mxu0 0.0
        %913 = vmatpush1.xpose.msra.mxu0 0.0
        %914 = vmatprep.subr.mxu0 0.0
        %915 = vmatpush1.xpose.msra.mxu0 0.0
        %916 = vmatprep.subr.mxu0 0.0
        %917 = vmatpush1.xpose.msra.mxu0 0.0
        %918 = vmatprep.subr.mxu0 0.0
        %919 = vmatpush1.xpose.msra.mxu0 0.0
        %920 = vmatprep.subr.mxu0 0.0
        %921 = vmatpush1.xpose.msra.mxu0 0.0
        %922 = vmatprep.subr.mxu0 0.0
        %923 = vmatpush1.xpose.msra.mxu0 0.0
        %924 = vmatprep.subr.mxu0 0.0
        %925 = vmatpush1.xpose.msra.mxu0 0.0
        %926 = vmatprep.subr.mxu0 0.0
        %927 = vmatpush1.xpose.msra.mxu0 0.0
        %928 = vmatprep.subr.mxu0 0.0
        %929 = vmatpush1.xpose.msra.mxu0 0.0
        %930 = vmatprep.subr.mxu0 0.0
        %931 = vmatpush1.xpose.msra.mxu0 0.0
        %932 = vmatprep.subr.mxu0 0.0
        %933 = vmatpush1.xpose.msra.mxu0 0.0
        %934 = vmatprep.subr.mxu0 0.0
        %935 = vmatpush1.xpose.msra.mxu0 0.0
        %936 = vmatprep.subr.mxu0 0.0
        %937 = vmatpush1.xpose.msra.mxu0 0.0
        %938 = vmatprep.subr.mxu0 0.0
        %939 = vmatpush1.xpose.msra.mxu0 0.0
        %940 = vmatprep.subr.mxu0 0.0
        %941 = vmatpush1.xpose.msra.mxu0 0.0
        %942 = vmatprep.subr.mxu0 0.0
        %943 = vmatpush1.xpose.msra.mxu0 0.0
        %944 = vmatprep.subr.mxu0 0.0
        %945 = vmatpush1.xpose.msra.mxu0 0.0
        %946 = vmatprep.subr.mxu0 0.0
        %947 = vmatpush1.xpose.msra.mxu0 0.0
        %948 = vmatprep.subr.mxu0 0.0
        %949 = vmatpush1.xpose.msra.mxu0 0.0
        %950 = vmatprep.subr.mxu0 0.0
        %951 = vmatpush1.xpose.msra.mxu0 0.0
        %952 = vmatprep.mubr.f32.mxu0 0.0
        %953 = vmatmul.mubr.f32.gmra.mrb[0].mxu0 %v883
        %v954 = vpop.f32.mrb[0].mxu0
        %v955 = vadd.f32 0.0, %v954
        %v956 = vpop.f32.mrb[0].mxu0
        %957 = vdwg.mxu0
        %v958 = vsel %vm880, -1e+20, %v955
        %v959 = vmul.f32 %v958, 0.35355338
        %v960 = vsel %vm881, %v959, -inf
        %961 = vmax.xlane.f32.xlu0 %v960
        %v962 = vpop.xlane.xlu0 %961
        %v963 = vsub.f32 %v959, %v962
        %v964 = vmul.f32 %v963, 1.442695
        %v965 = vpow.pop %v964
        %v966 = vsel %vm881, %v965, 0.0
        %967 = vadd.xlane.f32.xlu0 %v966
        %v968 = vpop.xlane.xlu0 %967
        %v969 = vrcp.pop %v968
        %v970 = vmul.f32 %v965, %v969
        %v972 = vsel %vm881, %v970, 0
        %974 = vmatprep.subr.mxu0 0.0
        %975 = vmatpush1.msra.mxu0 %v876
        %976 = vmatprep.subr.mxu0 0.0
        %977 = vmatpush1.msra.mxu0 0.0
        %978 = vmatprep.subr.mxu0 0.0
        %979 = vmatpush1.msra.mxu0 0.0
        %980 = vmatprep.subr.mxu0 0.0
        %981 = vmatpush1.msra.mxu0 0.0
        %982 = vmatprep.subr.mxu0 0.0
        %983 = vmatpush1.msra.mxu0 0.0
        %984 = vmatprep.subr.mxu0 0.0
        %985 = vmatpush1.msra.mxu0 0.0
        %986 = vmatprep.subr.mxu0 0.0
        %987 = vmatpush1.msra.mxu0 0.0
        %988 = vmatprep.subr.mxu0 0.0
        %989 = vmatpush1.msra.mxu0 0.0
        %990 = vmatprep.subr.mxu0 0.0
        %991 = vmatpush1.msra.mxu0 0.0
        %992 = vmatprep.subr.mxu0 0.0
        %993 = vmatpush1.msra.mxu0 0.0
        %994 = vmatprep.subr.mxu0 0.0
        %995 = vmatpush1.msra.mxu0 0.0
        %996 = vmatprep.subr.mxu0 0.0
        %997 = vmatpush1.msra.mxu0 0.0
        %998 = vmatprep.subr.mxu0 0.0
        %999 = vmatpush1.msra.mxu0 0.0
        %1000 = vmatprep.subr.mxu0 0.0
        %1001 = vmatpush1.msra.mxu0 0.0
        %1002 = vmatprep.subr.mxu0 0.0
        %1003 = vmatpush1.msra.mxu0 0.0
        %1004 = vmatprep.subr.mxu0 0.0
        %1005 = vmatpush1.msra.mxu0 0.0
        %1006 = vmatprep.subr.mxu0 0.0
        %1007 = vmatpush1.msra.mxu0 0.0
        %1008 = vmatprep.subr.mxu0 0.0
        %1009 = vmatpush1.msra.mxu0 0.0
        %1010 = vmatprep.subr.mxu0 0.0
        %1011 = vmatpush1.msra.mxu0 0.0
        %1012 = vmatprep.subr.mxu0 0.0
        %1013 = vmatpush1.msra.mxu0 0.0
        %1014 = vmatprep.subr.mxu0 0.0
        %1015 = vmatpush1.msra.mxu0 0.0
        %1016 = vmatprep.subr.mxu0 0.0
        %1017 = vmatpush1.msra.mxu0 0.0
        %1018 = vmatprep.subr.mxu0 0.0
        %1019 = vmatpush1.msra.mxu0 0.0
        %1020 = vmatprep.subr.mxu0 0.0
        %1021 = vmatpush1.msra.mxu0 0.0
        %1022 = vmatprep.subr.mxu0 0.0
        %1023 = vmatpush1.msra.mxu0 0.0
        %1024 = vmatprep.subr.mxu0 0.0
        %1025 = vmatpush1.msra.mxu0 0.0
        %1026 = vmatprep.subr.mxu0 0.0
        %1027 = vmatpush1.msra.mxu0 0.0
        %1028 = vmatprep.subr.mxu0 0.0
        %1029 = vmatpush1.msra.mxu0 0.0
        %1030 = vmatprep.subr.mxu0 0.0
        %1031 = vmatpush1.msra.mxu0 0.0
        %1032 = vmatprep.subr.mxu0 0.0
        %1033 = vmatpush1.msra.mxu0 0.0
        %1034 = vmatprep.subr.mxu0 0.0
        %1035 = vmatpush1.msra.mxu0 0.0
        %1036 = vmatprep.subr.mxu0 0.0
        %1037 = vmatpush1.msra.mxu0 0.0
        %1038 = vmatprep.mubr.f32.mxu0 0.0
        %1039 = vmatmul.mubr.f32.gmra.mrb[0].mxu0 %v972
        %v1040 = vpop.f32.mrb[0].mxu0
        %v1041 = vadd.f32 0.0, %v1040
        %v1042 = vpop.f32.mrb[0].mxu0
        %1043 = vdwg.mxu0
        %1044 = vrot.lane.b32.xlu0 %v714, 120
        %v1045 = vpop.permute.xlu0 %1044
        %1046 = vrot.lane.b32.xlu0 %v795, 120
        %v1047 = vpop.permute.xlu0 %1046
        %v1048 = vsel %vm881, %v1045, 0
        %v1050 = vsel %vm881, %v1047, 0
        %1052 = vmatprep.subr.mxu0 0.0
        %1053 = vmatpush1.xpose.msra.mxu0 %v1050
        %1054 = vmatprep.subr.mxu0 0.0
        %1055 = vmatpush1.xpose.msra.mxu0 0.0
        %1056 = vmatprep.subr.mxu0 0.0
        %1057 = vmatpush1.xpose.msra.mxu0 0.0
        %1058 = vmatprep.subr.mxu0 0.0
        %1059 = vmatpush1.xpose.msra.mxu0 0.0
        %1060 = vmatprep.subr.mxu0 0.0
        %1061 = vmatpush1.xpose.msra.mxu0 0.0
        %1062 = vmatprep.subr.mxu0 0.0
        %1063 = vmatpush1.xpose.msra.mxu0 0.0
        %1064 = vmatprep.subr.mxu0 0.0
        %1065 = vmatpush1.xpose.msra.mxu0 0.0
        %1066 = vmatprep.subr.mxu0 0.0
        %1067 = vmatpush1.xpose.msra.mxu0 0.0
        %1068 = vmatprep.subr.mxu0 0.0
        %1069 = vmatpush1.xpose.msra.mxu0 0.0
        %1070 = vmatprep.subr.mxu0 0.0
        %1071 = vmatpush1.xpose.msra.mxu0 0.0
        %1072 = vmatprep.subr.mxu0 0.0
        %1073 = vmatpush1.xpose.msra.mxu0 0.0
        %1074 = vmatprep.subr.mxu0 0.0
        %1075 = vmatpush1.xpose.msra.mxu0 0.0
        %1076 = vmatprep.subr.mxu0 0.0
        %1077 = vmatpush1.xpose.msra.mxu0 0.0
        %1078 = vmatprep.subr.mxu0 0.0
        %1079 = vmatpush1.xpose.msra.mxu0 0.0
        %1080 = vmatprep.subr.mxu0 0.0
        %1081 = vmatpush1.xpose.msra.mxu0 0.0
        %1082 = vmatprep.subr.mxu0 0.0
        %1083 = vmatpush1.xpose.msra.mxu0 0.0
        %1084 = vmatprep.subr.mxu0 0.0
        %1085 = vmatpush1.xpose.msra.mxu0 0.0
        %1086 = vmatprep.subr.mxu0 0.0
        %1087 = vmatpush1.xpose.msra.mxu0 0.0
        %1088 = vmatprep.subr.mxu0 0.0
        %1089 = vmatpush1.xpose.msra.mxu0 0.0
        %1090 = vmatprep.subr.mxu0 0.0
        %1091 = vmatpush1.xpose.msra.mxu0 0.0
        %1092 = vmatprep.subr.mxu0 0.0
        %1093 = vmatpush1.xpose.msra.mxu0 0.0
        %1094 = vmatprep.subr.mxu0 0.0
        %1095 = vmatpush1.xpose.msra.mxu0 0.0
        %1096 = vmatprep.subr.mxu0 0.0
        %1097 = vmatpush1.xpose.msra.mxu0 0.0
        %1098 = vmatprep.subr.mxu0 0.0
        %1099 = vmatpush1.xpose.msra.mxu0 0.0
        %1100 = vmatprep.subr.mxu0 0.0
        %1101 = vmatpush1.xpose.msra.mxu0 0.0
        %1102 = vmatprep.subr.mxu0 0.0
        %1103 = vmatpush1.xpose.msra.mxu0 0.0
        %1104 = vmatprep.subr.mxu0 0.0
        %1105 = vmatpush1.xpose.msra.mxu0 0.0
        %1106 = vmatprep.subr.mxu0 0.0
        %1107 = vmatpush1.xpose.msra.mxu0 0.0
        %1108 = vmatprep.subr.mxu0 0.0
        %1109 = vmatpush1.xpose.msra.mxu0 0.0
        %1110 = vmatprep.subr.mxu0 0.0
        %1111 = vmatpush1.xpose.msra.mxu0 0.0
        %1112 = vmatprep.subr.mxu0 0.0
        %1113 = vmatpush1.xpose.msra.mxu0 0.0
        %1114 = vmatprep.subr.mxu0 0.0
        %1115 = vmatpush1.xpose.msra.mxu0 0.0
        %1116 = vmatprep.mubr.f32.mxu0 0.0
        %1117 = vmatmul.mubr.f32.gmra.mrb[0].mxu0 %v1048
        %v1118 = vpop.f32.mrb[0].mxu0
        %v1119 = vadd.f32 0.0, %v1118
        %v1120 = vpop.f32.mrb[0].mxu0
        %1121 = vdwg.mxu0
        %v1122 = vsel %vm880, -1e+20, %v1119
        %v1123 = vmul.f32 %v1122, 0.35355338
        %v1124 = vsel %vm881, %v1123, -inf
        %1125 = vmax.xlane.f32.xlu0 %v1124
        %v1126 = vpop.xlane.xlu0 %1125
        %v1127 = vsub.f32 %v1123, %v1126
        %v1128 = vmul.f32 %v1127, 1.442695
        %v1129 = vpow.pop %v1128
        %v1130 = vsel %vm881, %v1129, 0.0
        %1131 = vadd.xlane.f32.xlu0 %v1130
        %v1132 = vpop.xlane.xlu0 %1131
        %v1133 = vrcp.pop %v1132
        %v1134 = vmul.f32 %v1129, %v1133
        %1136 = vrot.lane.b32.xlu0 %v876, 120
        %v1137 = vpop.permute.xlu0 %1136
        %v1140 = vsel %vm881, %v1134, 0
        %1142 = vmatprep.subr.mxu0 0.0
        %1143 = vmatpush1.msra.mxu0 %v1137
        %1144 = vmatprep.subr.mxu0 0.0
        %1145 = vmatpush1.msra.mxu0 0.0
        %1146 = vmatprep.subr.mxu0 0.0
        %1147 = vmatpush1.msra.mxu0 0.0
        %1148 = vmatprep.subr.mxu0 0.0
        %1149 = vmatpush1.msra.mxu0 0.0
        %1150 = vmatprep.subr.mxu0 0.0
        %1151 = vmatpush1.msra.mxu0 0.0
        %1152 = vmatprep.subr.mxu0 0.0
        %1153 = vmatpush1.msra.mxu0 0.0
        %1154 = vmatprep.subr.mxu0 0.0
        %1155 = vmatpush1.msra.mxu0 0.0
        %1156 = vmatprep.subr.mxu0 0.0
        %1157 = vmatpush1.msra.mxu0 0.0
        %1158 = vmatprep.subr.mxu0 0.0
        %1159 = vmatpush1.msra.mxu0 0.0
        %1160 = vmatprep.subr.mxu0 0.0
        %1161 = vmatpush1.msra.mxu0 0.0
        %1162 = vmatprep.subr.mxu0 0.0
        %1163 = vmatpush1.msra.mxu0 0.0
        %1164 = vmatprep.subr.mxu0 0.0
        %1165 = vmatpush1.msra.mxu0 0.0
        %1166 = vmatprep.subr.mxu0 0.0
        %1167 = vmatpush1.msra.mxu0 0.0
        %1168 = vmatprep.subr.mxu0 0.0
        %1169 = vmatpush1.msra.mxu0 0.0
        %1170 = vmatprep.subr.mxu0 0.0
        %1171 = vmatpush1.msra.mxu0 0.0
        %1172 = vmatprep.subr.mxu0 0.0
        %1173 = vmatpush1.msra.mxu0 0.0
        %1174 = vmatprep.subr.mxu0 0.0
        %1175 = vmatpush1.msra.mxu0 0.0
        %1176 = vmatprep.subr.mxu0 0.0
        %1177 = vmatpush1.msra.mxu0 0.0
        %1178 = vmatprep.subr.mxu0 0.0
        %1179 = vmatpush1.msra.mxu0 0.0
        %1180 = vmatprep.subr.mxu0 0.0
        %1181 = vmatpush1.msra.mxu0 0.0
        %1182 = vmatprep.subr.mxu0 0.0
        %1183 = vmatpush1.msra.mxu0 0.0
        %1184 = vmatprep.subr.mxu0 0.0
        %1185 = vmatpush1.msra.mxu0 0.0
        %1186 = vmatprep.subr.mxu0 0.0
        %1187 = vmatpush1.msra.mxu0 0.0
        %1188 = vmatprep.subr.mxu0 0.0
        %1189 = vmatpush1.msra.mxu0 0.0
        %1190 = vmatprep.subr.mxu0 0.0
        %1191 = vmatpush1.msra.mxu0 0.0
        %1192 = vmatprep.subr.mxu0 0.0
        %1193 = vmatpush1.msra.mxu0 0.0
        %1194 = vmatprep.subr.mxu0 0.0
        %1195 = vmatpush1.msra.mxu0 0.0
        %1196 = vmatprep.subr.mxu0 0.0
        %1197 = vmatpush1.msra.mxu0 0.0
        %1198 = vmatprep.subr.mxu0 0.0
        %1199 = vmatpush1.msra.mxu0 0.0
        %1200 = vmatprep.subr.mxu0 0.0
        %1201 = vmatpush1.msra.mxu0 0.0
        %1202 = vmatprep.subr.mxu0 0.0
        %1203 = vmatpush1.msra.mxu0 0.0
        %1204 = vmatprep.subr.mxu0 0.0
        %1205 = vmatpush1.msra.mxu0 0.0
        %1206 = vmatprep.mubr.f32.mxu0 0.0
        %1207 = vmatmul.mubr.f32.gmra.mrb[0].mxu0 %v1140
        %v1208 = vpop.f32.mrb[0].mxu0
        %v1209 = vadd.f32 0.0, %v1208
        %v1210 = vpop.f32.mrb[0].mxu0
        %1211 = vdwg.mxu0
        %1212 = vrot.lane.b32.xlu0 %v714, 112
        %v1213 = vpop.permute.xlu0 %1212
        %1214 = vrot.lane.b32.xlu0 %v795, 112
        %v1215 = vpop.permute.xlu0 %1214
        %v1216 = vsel %vm881, %v1213, 0
        %v1218 = vsel %vm881, %v1215, 0
        %1220 = vmatprep.subr.mxu0 0.0
        %1221 = vmatpush1.xpose.msra.mxu0 %v1218
        %1222 = vmatprep.subr.mxu0 0.0
        %1223 = vmatpush1.xpose.msra.mxu0 0.0
        %1224 = vmatprep.subr.mxu0 0.0
        %1225 = vmatpush1.xpose.msra.mxu0 0.0
        %1226 = vmatprep.subr.mxu0 0.0
        %1227 = vmatpush1.xpose.msra.mxu0 0.0
        %1228 = vmatprep.subr.mxu0 0.0
        %1229 = vmatpush1.xpose.msra.mxu0 0.0
        %1230 = vmatprep.subr.mxu0 0.0
        %1231 = vmatpush1.xpose.msra.mxu0 0.0
        %1232 = vmatprep.subr.mxu0 0.0
        %1233 = vmatpush1.xpose.msra.mxu0 0.0
        %1234 = vmatprep.subr.mxu0 0.0
        %1235 = vmatpush1.xpose.msra.mxu0 0.0
        %1236 = vmatprep.subr.mxu0 0.0
        %1237 = vmatpush1.xpose.msra.mxu0 0.0
        %1238 = vmatprep.subr.mxu0 0.0
        %1239 = vmatpush1.xpose.msra.mxu0 0.0
        %1240 = vmatprep.subr.mxu0 0.0
        %1241 = vmatpush1.xpose.msra.mxu0 0.0
        %1242 = vmatprep.subr.mxu0 0.0
        %1243 = vmatpush1.xpose.msra.mxu0 0.0
        %1244 = vmatprep.subr.mxu0 0.0
        %1245 = vmatpush1.xpose.msra.mxu0 0.0
        %1246 = vmatprep.subr.mxu0 0.0
        %1247 = vmatpush1.xpose.msra.mxu0 0.0
        %1248 = vmatprep.subr.mxu0 0.0
        %1249 = vmatpush1.xpose.msra.mxu0 0.0
        %1250 = vmatprep.subr.mxu0 0.0
        %1251 = vmatpush1.xpose.msra.mxu0 0.0
        %1252 = vmatprep.subr.mxu0 0.0
        %1253 = vmatpush1.xpose.msra.mxu0 0.0
        %1254 = vmatprep.subr.mxu0 0.0
        %1255 = vmatpush1.xpose.msra.mxu0 0.0
        %1256 = vmatprep.subr.mxu0 0.0
        %1257 = vmatpush1.xpose.msra.mxu0 0.0
        %1258 = vmatprep.subr.mxu0 0.0
        %1259 = vmatpush1.xpose.msra.mxu0 0.0
        %1260 = vmatprep.subr.mxu0 0.0
        %1261 = vmatpush1.xpose.msra.mxu0 0.0
        %1262 = vmatprep.subr.mxu0 0.0
        %1263 = vmatpush1.xpose.msra.mxu0 0.0
        %1264 = vmatprep.subr.mxu0 0.0
        %1265 = vmatpush1.xpose.msra.mxu0 0.0
        %1266 = vmatprep.subr.mxu0 0.0
        %1267 = vmatpush1.xpose.msra.mxu0 0.0
        %1268 = vmatprep.subr.mxu0 0.0
        %1269 = vmatpush1.xpose.msra.mxu0 0.0
        %1270 = vmatprep.subr.mxu0 0.0
        %1271 = vmatpush1.xpose.msra.mxu0 0.0
        %1272 = vmatprep.subr.mxu0 0.0
        %1273 = vmatpush1.xpose.msra.mxu0 0.0
        %1274 = vmatprep.subr.mxu0 0.0
        %1275 = vmatpush1.xpose.msra.mxu0 0.0
        %1276 = vmatprep.subr.mxu0 0.0
        %1277 = vmatpush1.xpose.msra.mxu0 0.0
        %1278 = vmatprep.subr.mxu0 0.0
        %1279 = vmatpush1.xpose.msra.mxu0 0.0
        %1280 = vmatprep.subr.mxu0 0.0
        %1281 = vmatpush1.xpose.msra.mxu0 0.0
        %1282 = vmatprep.subr.mxu0 0.0
        %1283 = vmatpush1.xpose.msra.mxu0 0.0
        %1284 = vmatprep.mubr.f32.mxu0 0.0
        %1285 = vmatmul.mubr.f32.gmra.mrb[0].mxu0 %v1216
        %v1286 = vpop.f32.mrb[0].mxu0
        %v1287 = vadd.f32 0.0, %v1286
        %v1288 = vpop.f32.mrb[0].mxu0
        %1289 = vdwg.mxu0
        %v1290 = vsel %vm880, -1e+20, %v1287
        %v1291 = vmul.f32 %v1290, 0.35355338
        %v1292 = vsel %vm881, %v1291, -inf
        %1293 = vmax.xlane.f32.xlu0 %v1292
        %v1294 = vpop.xlane.xlu0 %1293
        %v1295 = vsub.f32 %v1291, %v1294
        %v1296 = vmul.f32 %v1295, 1.442695
        %v1297 = vpow.pop %v1296
        %v1298 = vsel %vm881, %v1297, 0.0
        %1299 = vadd.xlane.f32.xlu0 %v1298
        %v1300 = vpop.xlane.xlu0 %1299
        %v1301 = vrcp.pop %v1300
        %v1302 = vmul.f32 %v1297, %v1301
        %1303 = vrot.lane.b32.xlu0 %v876, 112
        %v1304 = vpop.permute.xlu0 %1303
        %v1307 = vsel %vm881, %v1302, 0
        %1309 = vmatprep.subr.mxu0 0.0
        %1310 = vmatpush1.msra.mxu0 %v1304
        %1311 = vmatprep.subr.mxu0 0.0
        %1312 = vmatpush1.msra.mxu0 0.0
        %1313 = vmatprep.subr.mxu0 0.0
        %1314 = vmatpush1.msra.mxu0 0.0
        %1315 = vmatprep.subr.mxu0 0.0
        %1316 = vmatpush1.msra.mxu0 0.0
        %1317 = vmatprep.subr.mxu0 0.0
        %1318 = vmatpush1.msra.mxu0 0.0
        %1319 = vmatprep.subr.mxu0 0.0
        %1320 = vmatpush1.msra.mxu0 0.0
        %1321 = vmatprep.subr.mxu0 0.0
        %1322 = vmatpush1.msra.mxu0 0.0
        %1323 = vmatprep.subr.mxu0 0.0
        %1324 = vmatpush1.msra.mxu0 0.0
        %1325 = vmatprep.subr.mxu0 0.0
        %1326 = vmatpush1.msra.mxu0 0.0
        %1327 = vmatprep.subr.mxu0 0.0
        %1328 = vmatpush1.msra.mxu0 0.0
        %1329 = vmatprep.subr.mxu0 0.0
        %1330 = vmatpush1.msra.mxu0 0.0
        %1331 = vmatprep.subr.mxu0 0.0
        %1332 = vmatpush1.msra.mxu0 0.0
        %1333 = vmatprep.subr.mxu0 0.0
        %1334 = vmatpush1.msra.mxu0 0.0
        %1335 = vmatprep.subr.mxu0 0.0
        %1336 = vmatpush1.msra.mxu0 0.0
        %1337 = vmatprep.subr.mxu0 0.0
        %1338 = vmatpush1.msra.mxu0 0.0
        %1339 = vmatprep.subr.mxu0 0.0
        %1340 = vmatpush1.msra.mxu0 0.0
        %1341 = vmatprep.subr.mxu0 0.0
        %1342 = vmatpush1.msra.mxu0 0.0
        %1343 = vmatprep.subr.mxu0 0.0
        %1344 = vmatpush1.msra.mxu0 0.0
        %1345 = vmatprep.subr.mxu0 0.0
        %1346 = vmatpush1.msra.mxu0 0.0
        %1347 = vmatprep.subr.mxu0 0.0
        %1348 = vmatpush1.msra.mxu0 0.0
        %1349 = vmatprep.subr.mxu0 0.0
        %1350 = vmatpush1.msra.mxu0 0.0
        %1351 = vmatprep.subr.mxu0 0.0
        %1352 = vmatpush1.msra.mxu0 0.0
        %1353 = vmatprep.subr.mxu0 0.0
        %1354 = vmatpush1.msra.mxu0 0.0
        %1355 = vmatprep.subr.mxu0 0.0
        %1356 = vmatpush1.msra.mxu0 0.0
        %1357 = vmatprep.subr.mxu0 0.0
        %1358 = vmatpush1.msra.mxu0 0.0
        %1359 = vmatprep.subr.mxu0 0.0
        %1360 = vmatpush1.msra.mxu0 0.0
        %1361 = vmatprep.subr.mxu0 0.0
        %1362 = vmatpush1.msra.mxu0 0.0
        %1363 = vmatprep.subr.mxu0 0.0
        %1364 = vmatpush1.msra.mxu0 0.0
        %1365 = vmatprep.subr.mxu0 0.0
        %1366 = vmatpush1.msra.mxu0 0.0
        %1367 = vmatprep.subr.mxu0 0.0
        %1368 = vmatpush1.msra.mxu0 0.0
        %1369 = vmatprep.subr.mxu0 0.0
        %1370 = vmatpush1.msra.mxu0 0.0
        %1371 = vmatprep.subr.mxu0 0.0
        %1372 = vmatpush1.msra.mxu0 0.0
        %1373 = vmatprep.mubr.f32.mxu0 0.0
        %1374 = vmatmul.mubr.f32.gmra.mrb[0].mxu0 %v1307
        %v1375 = vpop.f32.mrb[0].mxu0
        %v1376 = vadd.f32 0.0, %v1375
        %v1377 = vpop.f32.mrb[0].mxu0
        %1378 = vdwg.mxu0
        %1379 = vrot.lane.b32.xlu0 %v714, 104
        %v1380 = vpop.permute.xlu0 %1379
        %1381 = vrot.lane.b32.xlu0 %v795, 104
        %v1382 = vpop.permute.xlu0 %1381
        %v1383 = vsel %vm881, %v1380, 0
        %v1385 = vsel %vm881, %v1382, 0
        %1387 = vmatprep.subr.mxu0 0.0
        %1388 = vmatpush1.xpose.msra.mxu0 %v1385
        %1389 = vmatprep.subr.mxu0 0.0
        %1390 = vmatpush1.xpose.msra.mxu0 0.0
        %1391 = vmatprep.subr.mxu0 0.0
        %1392 = vmatpush1.xpose.msra.mxu0 0.0
        %1393 = vmatprep.subr.mxu0 0.0
        %1394 = vmatpush1.xpose.msra.mxu0 0.0
        %1395 = vmatprep.subr.mxu0 0.0
        %1396 = vmatpush1.xpose.msra.mxu0 0.0
        %1397 = vmatprep.subr.mxu0 0.0
        %1398 = vmatpush1.xpose.msra.mxu0 0.0
        %1399 = vmatprep.subr.mxu0 0.0
        %1400 = vmatpush1.xpose.msra.mxu0 0.0
        %1401 = vmatprep.subr.mxu0 0.0
        %1402 = vmatpush1.xpose.msra.mxu0 0.0
        %1403 = vmatprep.subr.mxu0 0.0
        %1404 = vmatpush1.xpose.msra.mxu0 0.0
        %1405 = vmatprep.subr.mxu0 0.0
        %1406 = vmatpush1.xpose.msra.mxu0 0.0
        %1407 = vmatprep.subr.mxu0 0.0
        %1408 = vmatpush1.xpose.msra.mxu0 0.0
        %1409 = vmatprep.subr.mxu0 0.0
        %1410 = vmatpush1.xpose.msra.mxu0 0.0
        %1411 = vmatprep.subr.mxu0 0.0
        %1412 = vmatpush1.xpose.msra.mxu0 0.0
        %1413 = vmatprep.subr.mxu0 0.0
        %1414 = vmatpush1.xpose.msra.mxu0 0.0
        %1415 = vmatprep.subr.mxu0 0.0
        %1416 = vmatpush1.xpose.msra.mxu0 0.0
        %1417 = vmatprep.subr.mxu0 0.0
        %1418 = vmatpush1.xpose.msra.mxu0 0.0
        %1419 = vmatprep.subr.mxu0 0.0
        %1420 = vmatpush1.xpose.msra.mxu0 0.0
        %1421 = vmatprep.subr.mxu0 0.0
        %1422 = vmatpush1.xpose.msra.mxu0 0.0
        %1423 = vmatprep.subr.mxu0 0.0
        %1424 = vmatpush1.xpose.msra.mxu0 0.0
        %1425 = vmatprep.subr.mxu0 0.0
        %1426 = vmatpush1.xpose.msra.mxu0 0.0
        %1427 = vmatprep.subr.mxu0 0.0
        %1428 = vmatpush1.xpose.msra.mxu0 0.0
        %1429 = vmatprep.subr.mxu0 0.0
        %1430 = vmatpush1.xpose.msra.mxu0 0.0
        %1431 = vmatprep.subr.mxu0 0.0
        %1432 = vmatpush1.xpose.msra.mxu0 0.0
        %1433 = vmatprep.subr.mxu0 0.0
        %1434 = vmatpush1.xpose.msra.mxu0 0.0
        %1435 = vmatprep.subr.mxu0 0.0
        %1436 = vmatpush1.xpose.msra.mxu0 0.0
        %1437 = vmatprep.subr.mxu0 0.0
        %1438 = vmatpush1.xpose.msra.mxu0 0.0
        %1439 = vmatprep.subr.mxu0 0.0
        %1440 = vmatpush1.xpose.msra.mxu0 0.0
        %1441 = vmatprep.subr.mxu0 0.0
        %1442 = vmatpush1.xpose.msra.mxu0 0.0
        %1443 = vmatprep.subr.mxu0 0.0
        %1444 = vmatpush1.xpose.msra.mxu0 0.0
        %1445 = vmatprep.subr.mxu0 0.0
        %1446 = vmatpush1.xpose.msra.mxu0 0.0
        %1447 = vmatprep.subr.mxu0 0.0
        %1448 = vmatpush1.xpose.msra.mxu0 0.0
        %1449 = vmatprep.subr.mxu0 0.0
        %1450 = vmatpush1.xpose.msra.mxu0 0.0
        %1451 = vmatprep.mubr.f32.mxu0 0.0
        %1452 = vmatmul.mubr.f32.gmra.mrb[0].mxu0 %v1383
        %v1453 = vpop.f32.mrb[0].mxu0
        %v1454 = vadd.f32 0.0, %v1453
        %v1455 = vpop.f32.mrb[0].mxu0
        %1456 = vdwg.mxu0
        %v1457 = vsel %vm880, -1e+20, %v1454
        %v1458 = vmul.f32 %v1457, 0.35355338
        %v1459 = vsel %vm881, %v1458, -inf
        %1460 = vmax.xlane.f32.xlu0 %v1459
        %v1461 = vpop.xlane.xlu0 %1460
        %v1462 = vsub.f32 %v1458, %v1461
        %v1463 = vmul.f32 %v1462, 1.442695
        %v1464 = vpow.pop %v1463
        %v1465 = vsel %vm881, %v1464, 0.0
        %1466 = vadd.xlane.f32.xlu0 %v1465
        %v1467 = vpop.xlane.xlu0 %1466
        %v1468 = vrcp.pop %v1467
        %v1469 = vmul.f32 %v1464, %v1468
        %1470 = vrot.lane.b32.xlu0 %v876, 104
        %v1471 = vpop.permute.xlu0 %1470
        %v1474 = vsel %vm881, %v1469, 0
        %1476 = vmatprep.subr.mxu0 0.0
        %1477 = vmatpush1.msra.mxu0 %v1471
        %1478 = vmatprep.subr.mxu0 0.0
        %1479 = vmatpush1.msra.mxu0 0.0
        %1480 = vmatprep.subr.mxu0 0.0
        %1481 = vmatpush1.msra.mxu0 0.0
        %1482 = vmatprep.subr.mxu0 0.0
        %1483 = vmatpush1.msra.mxu0 0.0
        %1484 = vmatprep.subr.mxu0 0.0
        %1485 = vmatpush1.msra.mxu0 0.0
        %1486 = vmatprep.subr.mxu0 0.0
        %1487 = vmatpush1.msra.mxu0 0.0
        %1488 = vmatprep.subr.mxu0 0.0
        %1489 = vmatpush1.msra.mxu0 0.0
        %1490 = vmatprep.subr.mxu0 0.0
        %1491 = vmatpush1.msra.mxu0 0.0
        %1492 = vmatprep.subr.mxu0 0.0
        %1493 = vmatpush1.msra.mxu0 0.0
        %1494 = vmatprep.subr.mxu0 0.0
        %1495 = vmatpush1.msra.mxu0 0.0
        %1496 = vmatprep.subr.mxu0 0.0
        %1497 = vmatpush1.msra.mxu0 0.0
        %1498 = vmatprep.subr.mxu0 0.0
        %1499 = vmatpush1.msra.mxu0 0.0
        %1500 = vmatprep.subr.mxu0 0.0
        %1501 = vmatpush1.msra.mxu0 0.0
        %1502 = vmatprep.subr.mxu0 0.0
        %1503 = vmatpush1.msra.mxu0 0.0
        %1504 = vmatprep.subr.mxu0 0.0
        %1505 = vmatpush1.msra.mxu0 0.0
        %1506 = vmatprep.subr.mxu0 0.0
        %1507 = vmatpush1.msra.mxu0 0.0
        %1508 = vmatprep.subr.mxu0 0.0
        %1509 = vmatpush1.msra.mxu0 0.0
        %1510 = vmatprep.subr.mxu0 0.0
        %1511 = vmatpush1.msra.mxu0 0.0
        %1512 = vmatprep.subr.mxu0 0.0
        %1513 = vmatpush1.msra.mxu0 0.0
        %1514 = vmatprep.subr.mxu0 0.0
        %1515 = vmatpush1.msra.mxu0 0.0
        %1516 = vmatprep.subr.mxu0 0.0
        %1517 = vmatpush1.msra.mxu0 0.0
        %1518 = vmatprep.subr.mxu0 0.0
        %1519 = vmatpush1.msra.mxu0 0.0
        %1520 = vmatprep.subr.mxu0 0.0
        %1521 = vmatpush1.msra.mxu0 0.0
        %1522 = vmatprep.subr.mxu0 0.0
        %1523 = vmatpush1.msra.mxu0 0.0
        %1524 = vmatprep.subr.mxu0 0.0
        %1525 = vmatpush1.msra.mxu0 0.0
        %1526 = vmatprep.subr.mxu0 0.0
        %1527 = vmatpush1.msra.mxu0 0.0
        %1528 = vmatprep.subr.mxu0 0.0
        %1529 = vmatpush1.msra.mxu0 0.0
        %1530 = vmatprep.subr.mxu0 0.0
        %1531 = vmatpush1.msra.mxu0 0.0
        %1532 = vmatprep.subr.mxu0 0.0
        %1533 = vmatpush1.msra.mxu0 0.0
        %1534 = vmatprep.subr.mxu0 0.0
        %1535 = vmatpush1.msra.mxu0 0.0
        %1536 = vmatprep.subr.mxu0 0.0
        %1537 = vmatpush1.msra.mxu0 0.0
        %1538 = vmatprep.subr.mxu0 0.0
        %1539 = vmatpush1.msra.mxu0 0.0
        %1540 = vmatprep.mubr.f32.mxu0 0.0
        %1541 = vmatmul.mubr.f32.gmra.mrb[0].mxu0 %v1474
        %v1542 = vpop.f32.mrb[0].mxu0
        %v1543 = vadd.f32 0.0, %v1542
        %v1544 = vpop.f32.mrb[0].mxu0
        %1545 = vdwg.mxu0
        %1546 = vrot.lane.b32.xlu0 %v714, 96
        %v1547 = vpop.permute.xlu0 %1546
        %1548 = vrot.lane.b32.xlu0 %v795, 96
        %v1549 = vpop.permute.xlu0 %1548
        %v1550 = vsel %vm881, %v1547, 0
        %v1552 = vsel %vm881, %v1549, 0
        %1554 = vmatprep.subr.mxu0 0.0
        %1555 = vmatpush1.xpose.msra.mxu0 %v1552
        %1556 = vmatprep.subr.mxu0 0.0
        %1557 = vmatpush1.xpose.msra.mxu0 0.0
        %1558 = vmatprep.subr.mxu0 0.0
        %1559 = vmatpush1.xpose.msra.mxu0 0.0
        %1560 = vmatprep.subr.mxu0 0.0
        %1561 = vmatpush1.xpose.msra.mxu0 0.0
        %1562 = vmatprep.subr.mxu0 0.0
        %1563 = vmatpush1.xpose.msra.mxu0 0.0
        %1564 = vmatprep.subr.mxu0 0.0
        %1565 = vmatpush1.xpose.msra.mxu0 0.0
        %1566 = vmatprep.subr.mxu0 0.0
        %1567 = vmatpush1.xpose.msra.mxu0 0.0
        %1568 = vmatprep.subr.mxu0 0.0
        %1569 = vmatpush1.xpose.msra.mxu0 0.0
        %1570 = vmatprep.subr.mxu0 0.0
        %1571 = vmatpush1.xpose.msra.mxu0 0.0
        %1572 = vmatprep.subr.mxu0 0.0
        %1573 = vmatpush1.xpose.msra.mxu0 0.0
        %1574 = vmatprep.subr.mxu0 0.0
        %1575 = vmatpush1.xpose.msra.mxu0 0.0
        %1576 = vmatprep.subr.mxu0 0.0
        %1577 = vmatpush1.xpose.msra.mxu0 0.0
        %1578 = vmatprep.subr.mxu0 0.0
        %1579 = vmatpush1.xpose.msra.mxu0 0.0
        %1580 = vmatprep.subr.mxu0 0.0
        %1581 = vmatpush1.xpose.msra.mxu0 0.0
        %1582 = vmatprep.subr.mxu0 0.0
        %1583 = vmatpush1.xpose.msra.mxu0 0.0
        %1584 = vmatprep.subr.mxu0 0.0
        %1585 = vmatpush1.xpose.msra.mxu0 0.0
        %1586 = vmatprep.subr.mxu0 0.0
        %1587 = vmatpush1.xpose.msra.mxu0 0.0
        %1588 = vmatprep.subr.mxu0 0.0
        %1589 = vmatpush1.xpose.msra.mxu0 0.0
        %1590 = vmatprep.subr.mxu0 0.0
        %1591 = vmatpush1.xpose.msra.mxu0 0.0
        %1592 = vmatprep.subr.mxu0 0.0
        %1593 = vmatpush1.xpose.msra.mxu0 0.0
        %1594 = vmatprep.subr.mxu0 0.0
        %1595 = vmatpush1.xpose.msra.mxu0 0.0
        %1596 = vmatprep.subr.mxu0 0.0
        %1597 = vmatpush1.xpose.msra.mxu0 0.0
        %1598 = vmatprep.subr.mxu0 0.0
        %1599 = vmatpush1.xpose.msra.mxu0 0.0
        %1600 = vmatprep.subr.mxu0 0.0
        %1601 = vmatpush1.xpose.msra.mxu0 0.0
        %1602 = vmatprep.subr.mxu0 0.0
        %1603 = vmatpush1.xpose.msra.mxu0 0.0
        %1604 = vmatprep.subr.mxu0 0.0
        %1605 = vmatpush1.xpose.msra.mxu0 0.0
        %1606 = vmatprep.subr.mxu0 0.0
        %1607 = vmatpush1.xpose.msra.mxu0 0.0
        %1608 = vmatprep.subr.mxu0 0.0
        %1609 = vmatpush1.xpose.msra.mxu0 0.0
        %1610 = vmatprep.subr.mxu0 0.0
        %1611 = vmatpush1.xpose.msra.mxu0 0.0
        %1612 = vmatprep.subr.mxu0 0.0
        %1613 = vmatpush1.xpose.msra.mxu0 0.0
        %1614 = vmatprep.subr.mxu0 0.0
        %1615 = vmatpush1.xpose.msra.mxu0 0.0
        %1616 = vmatprep.subr.mxu0 0.0
        %1617 = vmatpush1.xpose.msra.mxu0 0.0
        %1618 = vmatprep.mubr.f32.mxu0 0.0
        %1619 = vmatmul.mubr.f32.gmra.mrb[0].mxu0 %v1550
        %v1620 = vpop.f32.mrb[0].mxu0
        %v1621 = vadd.f32 0.0, %v1620
        %v1622 = vpop.f32.mrb[0].mxu0
        %1623 = vdwg.mxu0
        %v1624 = vsel %vm880, -1e+20, %v1621
        %v1625 = vmul.f32 %v1624, 0.35355338
        %v1626 = vsel %vm881, %v1625, -inf
        %1627 = vmax.xlane.f32.xlu0 %v1626
        %v1628 = vpop.xlane.xlu0 %1627
        %v1629 = vsub.f32 %v1625, %v1628
        %v1630 = vmul.f32 %v1629, 1.442695
        %v1631 = vpow.pop %v1630
        %v1632 = vsel %vm881, %v1631, 0.0
        %1633 = vadd.xlane.f32.xlu0 %v1632
        %v1634 = vpop.xlane.xlu0 %1633
        %v1635 = vrcp.pop %v1634
        %v1636 = vmul.f32 %v1631, %v1635
        %1637 = vrot.lane.b32.xlu0 %v876, 96
        %v1638 = vpop.permute.xlu0 %1637
        %v1641 = vsel %vm881, %v1636, 0
        %1643 = vmatprep.subr.mxu0 0.0
        %1644 = vmatpush1.msra.mxu0 %v1638
        %1645 = vmatprep.subr.mxu0 0.0
        %1646 = vmatpush1.msra.mxu0 0.0
        %1647 = vmatprep.subr.mxu0 0.0
        %1648 = vmatpush1.msra.mxu0 0.0
        %1649 = vmatprep.subr.mxu0 0.0
        %1650 = vmatpush1.msra.mxu0 0.0
        %1651 = vmatprep.subr.mxu0 0.0
        %1652 = vmatpush1.msra.mxu0 0.0
        %1653 = vmatprep.subr.mxu0 0.0
        %1654 = vmatpush1.msra.mxu0 0.0
        %1655 = vmatprep.subr.mxu0 0.0
        %1656 = vmatpush1.msra.mxu0 0.0
        %1657 = vmatprep.subr.mxu0 0.0
        %1658 = vmatpush1.msra.mxu0 0.0
        %1659 = vmatprep.subr.mxu0 0.0
        %1660 = vmatpush1.msra.mxu0 0.0
        %1661 = vmatprep.subr.mxu0 0.0
        %1662 = vmatpush1.msra.mxu0 0.0
        %1663 = vmatprep.subr.mxu0 0.0
        %1664 = vmatpush1.msra.mxu0 0.0
        %1665 = vmatprep.subr.mxu0 0.0
        %1666 = vmatpush1.msra.mxu0 0.0
        %1667 = vmatprep.subr.mxu0 0.0
        %1668 = vmatpush1.msra.mxu0 0.0
        %1669 = vmatprep.subr.mxu0 0.0
        %1670 = vmatpush1.msra.mxu0 0.0
        %1671 = vmatprep.subr.mxu0 0.0
        %1672 = vmatpush1.msra.mxu0 0.0
        %1673 = vmatprep.subr.mxu0 0.0
        %1674 = vmatpush1.msra.mxu0 0.0
        %1675 = vmatprep.subr.mxu0 0.0
        %1676 = vmatpush1.msra.mxu0 0.0
        %1677 = vmatprep.subr.mxu0 0.0
        %1678 = vmatpush1.msra.mxu0 0.0
        %1679 = vmatprep.subr.mxu0 0.0
        %1680 = vmatpush1.msra.mxu0 0.0
        %1681 = vmatprep.subr.mxu0 0.0
        %1682 = vmatpush1.msra.mxu0 0.0
        %1683 = vmatprep.subr.mxu0 0.0
        %1684 = vmatpush1.msra.mxu0 0.0
        %1685 = vmatprep.subr.mxu0 0.0
        %1686 = vmatpush1.msra.mxu0 0.0
        %1687 = vmatprep.subr.mxu0 0.0
        %1688 = vmatpush1.msra.mxu0 0.0
        %1689 = vmatprep.subr.mxu0 0.0
        %1690 = vmatpush1.msra.mxu0 0.0
        %1691 = vmatprep.subr.mxu0 0.0
        %1692 = vmatpush1.msra.mxu0 0.0
        %1693 = vmatprep.subr.mxu0 0.0
        %1694 = vmatpush1.msra.mxu0 0.0
        %1695 = vmatprep.subr.mxu0 0.0
        %1696 = vmatpush1.msra.mxu0 0.0
        %1697 = vmatprep.subr.mxu0 0.0
        %1698 = vmatpush1.msra.mxu0 0.0
        %1699 = vmatprep.subr.mxu0 0.0
        %1700 = vmatpush1.msra.mxu0 0.0
        %1701 = vmatprep.subr.mxu0 0.0
        %1702 = vmatpush1.msra.mxu0 0.0
        %1703 = vmatprep.subr.mxu0 0.0
        %1704 = vmatpush1.msra.mxu0 0.0
        %1705 = vmatprep.subr.mxu0 0.0
        %1706 = vmatpush1.msra.mxu0 0.0
        %1707 = vmatprep.mubr.f32.mxu0 0.0
        %1708 = vmatmul.mubr.f32.gmra.mrb[0].mxu0 %v1641
        %v1709 = vpop.f32.mrb[0].mxu0
        %v1710 = vadd.f32 0.0, %v1709
        %v1711 = vpop.f32.mrb[0].mxu0
        %1712 = vdwg.mxu0
        %1713 = vrot.lane.b32.xlu0 %v714, 88
        %v1714 = vpop.permute.xlu0 %1713
        %1715 = vrot.lane.b32.xlu0 %v795, 88
        %v1716 = vpop.permute.xlu0 %1715
        %v1717 = vsel %vm881, %v1714, 0
        %v1719 = vsel %vm881, %v1716, 0
        %1721 = vmatprep.subr.mxu0 0.0
        %1722 = vmatpush1.xpose.msra.mxu0 %v1719
        %1723 = vmatprep.subr.mxu0 0.0
        %1724 = vmatpush1.xpose.msra.mxu0 0.0
        %1725 = vmatprep.subr.mxu0 0.0
        %1726 = vmatpush1.xpose.msra.mxu0 0.0
        %1727 = vmatprep.subr.mxu0 0.0
        %1728 = vmatpush1.xpose.msra.mxu0 0.0
        %1729 = vmatprep.subr.mxu0 0.0
        %1730 = vmatpush1.xpose.msra.mxu0 0.0
        %1731 = vmatprep.subr.mxu0 0.0
        %1732 = vmatpush1.xpose.msra.mxu0 0.0
        %1733 = vmatprep.subr.mxu0 0.0
        %1734 = vmatpush1.xpose.msra.mxu0 0.0
        %1735 = vmatprep.subr.mxu0 0.0
        %1736 = vmatpush1.xpose.msra.mxu0 0.0
        %1737 = vmatprep.subr.mxu0 0.0
        %1738 = vmatpush1.xpose.msra.mxu0 0.0
        %1739 = vmatprep.subr.mxu0 0.0
        %1740 = vmatpush1.xpose.msra.mxu0 0.0
        %1741 = vmatprep.subr.mxu0 0.0
        %1742 = vmatpush1.xpose.msra.mxu0 0.0
        %1743 = vmatprep.subr.mxu0 0.0
        %1744 = vmatpush1.xpose.msra.mxu0 0.0
        %1745 = vmatprep.subr.mxu0 0.0
        %1746 = vmatpush1.xpose.msra.mxu0 0.0
        %1747 = vmatprep.subr.mxu0 0.0
        %1748 = vmatpush1.xpose.msra.mxu0 0.0
        %1749 = vmatprep.subr.mxu0 0.0
        %1750 = vmatpush1.xpose.msra.mxu0 0.0
        %1751 = vmatprep.subr.mxu0 0.0
        %1752 = vmatpush1.xpose.msra.mxu0 0.0
        %1753 = vmatprep.subr.mxu0 0.0
        %1754 = vmatpush1.xpose.msra.mxu0 0.0
        %1755 = vmatprep.subr.mxu0 0.0
        %1756 = vmatpush1.xpose.msra.mxu0 0.0
        %1757 = vmatprep.subr.mxu0 0.0
        %1758 = vmatpush1.xpose.msra.mxu0 0.0
        %1759 = vmatprep.subr.mxu0 0.0
        %1760 = vmatpush1.xpose.msra.mxu0 0.0
        %1761 = vmatprep.subr.mxu0 0.0
        %1762 = vmatpush1.xpose.msra.mxu0 0.0
        %1763 = vmatprep.subr.mxu0 0.0
        %1764 = vmatpush1.xpose.msra.mxu0 0.0
        %1765 = vmatprep.subr.mxu0 0.0
        %1766 = vmatpush1.xpose.msra.mxu0 0.0
        %1767 = vmatprep.subr.mxu0 0.0
        %1768 = vmatpush1.xpose.msra.mxu0 0.0
        %1769 = vmatprep.subr.mxu0 0.0
        %1770 = vmatpush1.xpose.msra.mxu0 0.0
        %1771 = vmatprep.subr.mxu0 0.0
        %1772 = vmatpush1.xpose.msra.mxu0 0.0
        %1773 = vmatprep.subr.mxu0 0.0
        %1774 = vmatpush1.xpose.msra.mxu0 0.0
        %1775 = vmatprep.subr.mxu0 0.0
        %1776 = vmatpush1.xpose.msra.mxu0 0.0
        %1777 = vmatprep.subr.mxu0 0.0
        %1778 = vmatpush1.xpose.msra.mxu0 0.0
        %1779 = vmatprep.subr.mxu0 0.0
        %1780 = vmatpush1.xpose.msra.mxu0 0.0
        %1781 = vmatprep.subr.mxu0 0.0
        %1782 = vmatpush1.xpose.msra.mxu0 0.0
        %1783 = vmatprep.subr.mxu0 0.0
        %1784 = vmatpush1.xpose.msra.mxu0 0.0
        %1785 = vmatprep.mubr.f32.mxu0 0.0
        %1786 = vmatmul.mubr.f32.gmra.mrb[0].mxu0 %v1717
        %v1787 = vpop.f32.mrb[0].mxu0
        %v1788 = vadd.f32 0.0, %v1787
        %v1789 = vpop.f32.mrb[0].mxu0
        %1790 = vdwg.mxu0
        %v1791 = vsel %vm880, -1e+20, %v1788
        %v1792 = vmul.f32 %v1791, 0.35355338
        %v1793 = vsel %vm881, %v1792, -inf
        %1794 = vmax.xlane.f32.xlu0 %v1793
        %v1795 = vpop.xlane.xlu0 %1794
        %v1796 = vsub.f32 %v1792, %v1795
        %v1797 = vmul.f32 %v1796, 1.442695
        %v1798 = vpow.pop %v1797
        %v1799 = vsel %vm881, %v1798, 0.0
        %1800 = vadd.xlane.f32.xlu0 %v1799
        %v1801 = vpop.xlane.xlu0 %1800
        %v1802 = vrcp.pop %v1801
        %v1803 = vmul.f32 %v1798, %v1802
        %1804 = vrot.lane.b32.xlu0 %v876, 88
        %v1805 = vpop.permute.xlu0 %1804
        %v1808 = vsel %vm881, %v1803, 0
        %1810 = vmatprep.subr.mxu0 0.0
        %1811 = vmatpush1.msra.mxu0 %v1805
        %1812 = vmatprep.subr.mxu0 0.0
        %1813 = vmatpush1.msra.mxu0 0.0
        %1814 = vmatprep.subr.mxu0 0.0
        %1815 = vmatpush1.msra.mxu0 0.0
        %1816 = vmatprep.subr.mxu0 0.0
        %1817 = vmatpush1.msra.mxu0 0.0
        %1818 = vmatprep.subr.mxu0 0.0
        %1819 = vmatpush1.msra.mxu0 0.0
        %1820 = vmatprep.subr.mxu0 0.0
        %1821 = vmatpush1.msra.mxu0 0.0
        %1822 = vmatprep.subr.mxu0 0.0
        %1823 = vmatpush1.msra.mxu0 0.0
        %1824 = vmatprep.subr.mxu0 0.0
        %1825 = vmatpush1.msra.mxu0 0.0
        %1826 = vmatprep.subr.mxu0 0.0
        %1827 = vmatpush1.msra.mxu0 0.0
        %1828 = vmatprep.subr.mxu0 0.0
        %1829 = vmatpush1.msra.mxu0 0.0
        %1830 = vmatprep.subr.mxu0 0.0
        %1831 = vmatpush1.msra.mxu0 0.0
        %1832 = vmatprep.subr.mxu0 0.0
        %1833 = vmatpush1.msra.mxu0 0.0
        %1834 = vmatprep.subr.mxu0 0.0
        %1835 = vmatpush1.msra.mxu0 0.0
        %1836 = vmatprep.subr.mxu0 0.0
        %1837 = vmatpush1.msra.mxu0 0.0
        %1838 = vmatprep.subr.mxu0 0.0
        %1839 = vmatpush1.msra.mxu0 0.0
        %1840 = vmatprep.subr.mxu0 0.0
        %1841 = vmatpush1.msra.mxu0 0.0
        %1842 = vmatprep.subr.mxu0 0.0
        %1843 = vmatpush1.msra.mxu0 0.0
        %1844 = vmatprep.subr.mxu0 0.0
        %1845 = vmatpush1.msra.mxu0 0.0
        %1846 = vmatprep.subr.mxu0 0.0
        %1847 = vmatpush1.msra.mxu0 0.0
        %1848 = vmatprep.subr.mxu0 0.0
        %1849 = vmatpush1.msra.mxu0 0.0
        %1850 = vmatprep.subr.mxu0 0.0
        %1851 = vmatpush1.msra.mxu0 0.0
        %1852 = vmatprep.subr.mxu0 0.0
        %1853 = vmatpush1.msra.mxu0 0.0
        %1854 = vmatprep.subr.mxu0 0.0
        %1855 = vmatpush1.msra.mxu0 0.0
        %1856 = vmatprep.subr.mxu0 0.0
        %1857 = vmatpush1.msra.mxu0 0.0
        %1858 = vmatprep.subr.mxu0 0.0
        %1859 = vmatpush1.msra.mxu0 0.0
        %1860 = vmatprep.subr.mxu0 0.0
        %1861 = vmatpush1.msra.mxu0 0.0
        %1862 = vmatprep.subr.mxu0 0.0
        %1863 = vmatpush1.msra.mxu0 0.0
        %1864 = vmatprep.subr.mxu0 0.0
        %1865 = vmatpush1.msra.mxu0 0.0
        %1866 = vmatprep.subr.mxu0 0.0
        %1867 = vmatpush1.msra.mxu0 0.0
        %1868 = vmatprep.subr.mxu0 0.0
        %1869 = vmatpush1.msra.mxu0 0.0
        %1870 = vmatprep.subr.mxu0 0.0
        %1871 = vmatpush1.msra.mxu0 0.0
        %1872 = vmatprep.subr.mxu0 0.0
        %1873 = vmatpush1.msra.mxu0 0.0
        %1874 = vmatprep.mubr.f32.mxu0 0.0
        %1875 = vmatmul.mubr.f32.gmra.mrb[0].mxu0 %v1808
        %v1876 = vpop.f32.mrb[0].mxu0
        %v1877 = vadd.f32 0.0, %v1876
        %v1878 = vpop.f32.mrb[0].mxu0
        %1879 = vdwg.mxu0
        %1880 = vrot.lane.b32.xlu0 %v714, 80
        %v1881 = vpop.permute.xlu0 %1880
        %1882 = vrot.lane.b32.xlu0 %v795, 80
        %v1883 = vpop.permute.xlu0 %1882
        %v1884 = vsel %vm881, %v1881, 0
        %v1886 = vsel %vm881, %v1883, 0
        %1888 = vmatprep.subr.mxu0 0.0
        %1889 = vmatpush1.xpose.msra.mxu0 %v1886
        %1890 = vmatprep.subr.mxu0 0.0
        %1891 = vmatpush1.xpose.msra.mxu0 0.0
        %1892 = vmatprep.subr.mxu0 0.0
        %1893 = vmatpush1.xpose.msra.mxu0 0.0
        %1894 = vmatprep.subr.mxu0 0.0
        %1895 = vmatpush1.xpose.msra.mxu0 0.0
        %1896 = vmatprep.subr.mxu0 0.0
        %1897 = vmatpush1.xpose.msra.mxu0 0.0
        %1898 = vmatprep.subr.mxu0 0.0
        %1899 = vmatpush1.xpose.msra.mxu0 0.0
        %1900 = vmatprep.subr.mxu0 0.0
        %1901 = vmatpush1.xpose.msra.mxu0 0.0
        %1902 = vmatprep.subr.mxu0 0.0
        %1903 = vmatpush1.xpose.msra.mxu0 0.0
        %1904 = vmatprep.subr.mxu0 0.0
        %1905 = vmatpush1.xpose.msra.mxu0 0.0
        %1906 = vmatprep.subr.mxu0 0.0
        %1907 = vmatpush1.xpose.msra.mxu0 0.0
        %1908 = vmatprep.subr.mxu0 0.0
        %1909 = vmatpush1.xpose.msra.mxu0 0.0
        %1910 = vmatprep.subr.mxu0 0.0
        %1911 = vmatpush1.xpose.msra.mxu0 0.0
        %1912 = vmatprep.subr.mxu0 0.0
        %1913 = vmatpush1.xpose.msra.mxu0 0.0
        %1914 = vmatprep.subr.mxu0 0.0
        %1915 = vmatpush1.xpose.msra.mxu0 0.0
        %1916 = vmatprep.subr.mxu0 0.0
        %1917 = vmatpush1.xpose.msra.mxu0 0.0
        %1918 = vmatprep.subr.mxu0 0.0
        %1919 = vmatpush1.xpose.msra.mxu0 0.0
        %1920 = vmatprep.subr.mxu0 0.0
        %1921 = vmatpush1.xpose.msra.mxu0 0.0
        %1922 = vmatprep.subr.mxu0 0.0
        %1923 = vmatpush1.xpose.msra.mxu0 0.0
        %1924 = vmatprep.subr.mxu0 0.0
        %1925 = vmatpush1.xpose.msra.mxu0 0.0
        %1926 = vmatprep.subr.mxu0 0.0
        %1927 = vmatpush1.xpose.msra.mxu0 0.0
        %1928 = vmatprep.subr.mxu0 0.0
        %1929 = vmatpush1.xpose.msra.mxu0 0.0
        %1930 = vmatprep.subr.mxu0 0.0
        %1931 = vmatpush1.xpose.msra.mxu0 0.0
        %1932 = vmatprep.subr.mxu0 0.0
        %1933 = vmatpush1.xpose.msra.mxu0 0.0
        %1934 = vmatprep.subr.mxu0 0.0
        %1935 = vmatpush1.xpose.msra.mxu0 0.0
        %1936 = vmatprep.subr.mxu0 0.0
        %1937 = vmatpush1.xpose.msra.mxu0 0.0
        %1938 = vmatprep.subr.mxu0 0.0
        %1939 = vmatpush1.xpose.msra.mxu0 0.0
        %1940 = vmatprep.subr.mxu0 0.0
        %1941 = vmatpush1.xpose.msra.mxu0 0.0
        %1942 = vmatprep.subr.mxu0 0.0
        %1943 = vmatpush1.xpose.msra.mxu0 0.0
        %1944 = vmatprep.subr.mxu0 0.0
        %1945 = vmatpush1.xpose.msra.mxu0 0.0
        %1946 = vmatprep.subr.mxu0 0.0
        %1947 = vmatpush1.xpose.msra.mxu0 0.0
        %1948 = vmatprep.subr.mxu0 0.0
        %1949 = vmatpush1.xpose.msra.mxu0 0.0
        %1950 = vmatprep.subr.mxu0 0.0
        %1951 = vmatpush1.xpose.msra.mxu0 0.0
        %1952 = vmatprep.mubr.f32.mxu0 0.0
        %1953 = vmatmul.mubr.f32.gmra.mrb[0].mxu0 %v1884
        %v1954 = vpop.f32.mrb[0].mxu0
        %v1955 = vadd.f32 0.0, %v1954
        %v1956 = vpop.f32.mrb[0].mxu0
        %1957 = vdwg.mxu0
        %v1958 = vsel %vm880, -1e+20, %v1955
        %v1959 = vmul.f32 %v1958, 0.35355338
        %v1960 = vsel %vm881, %v1959, -inf
        %1961 = vmax.xlane.f32.xlu0 %v1960
        %v1962 = vpop.xlane.xlu0 %1961
        %v1963 = vsub.f32 %v1959, %v1962
        %v1964 = vmul.f32 %v1963, 1.442695
        %v1965 = vpow.pop %v1964
        %v1966 = vsel %vm881, %v1965, 0.0
        %1967 = vadd.xlane.f32.xlu0 %v1966
        %v1968 = vpop.xlane.xlu0 %1967
        %v1969 = vrcp.pop %v1968
        %v1970 = vmul.f32 %v1965, %v1969
        %1971 = vrot.lane.b32.xlu0 %v876, 80
        %v1972 = vpop.permute.xlu0 %1971
        %v1975 = vsel %vm881, %v1970, 0
        %1977 = vmatprep.subr.mxu0 0.0
        %1978 = vmatpush1.msra.mxu0 %v1972
        %1979 = vmatprep.subr.mxu0 0.0
        %1980 = vmatpush1.msra.mxu0 0.0
        %1981 = vmatprep.subr.mxu0 0.0
        %1982 = vmatpush1.msra.mxu0 0.0
        %1983 = vmatprep.subr.mxu0 0.0
        %1984 = vmatpush1.msra.mxu0 0.0
        %1985 = vmatprep.subr.mxu0 0.0
        %1986 = vmatpush1.msra.mxu0 0.0
        %1987 = vmatprep.subr.mxu0 0.0
        %1988 = vmatpush1.msra.mxu0 0.0
        %1989 = vmatprep.subr.mxu0 0.0
        %1990 = vmatpush1.msra.mxu0 0.0
        %1991 = vmatprep.subr.mxu0 0.0
        %1992 = vmatpush1.msra.mxu0 0.0
        %1993 = vmatprep.subr.mxu0 0.0
        %1994 = vmatpush1.msra.mxu0 0.0
        %1995 = vmatprep.subr.mxu0 0.0
        %1996 = vmatpush1.msra.mxu0 0.0
        %1997 = vmatprep.subr.mxu0 0.0
        %1998 = vmatpush1.msra.mxu0 0.0
        %1999 = vmatprep.subr.mxu0 0.0
        %2000 = vmatpush1.msra.mxu0 0.0
        %2001 = vmatprep.subr.mxu0 0.0
        %2002 = vmatpush1.msra.mxu0 0.0
        %2003 = vmatprep.subr.mxu0 0.0
        %2004 = vmatpush1.msra.mxu0 0.0
        %2005 = vmatprep.subr.mxu0 0.0
        %2006 = vmatpush1.msra.mxu0 0.0
        %2007 = vmatprep.subr.mxu0 0.0
        %2008 = vmatpush1.msra.mxu0 0.0
        %2009 = vmatprep.subr.mxu0 0.0
        %2010 = vmatpush1.msra.mxu0 0.0
        %2011 = vmatprep.subr.mxu0 0.0
        %2012 = vmatpush1.msra.mxu0 0.0
        %2013 = vmatprep.subr.mxu0 0.0
        %2014 = vmatpush1.msra.mxu0 0.0
        %2015 = vmatprep.subr.mxu0 0.0
        %2016 = vmatpush1.msra.mxu0 0.0
        %2017 = vmatprep.subr.mxu0 0.0
        %2018 = vmatpush1.msra.mxu0 0.0
        %2019 = vmatprep.subr.mxu0 0.0
        %2020 = vmatpush1.msra.mxu0 0.0
        %2021 = vmatprep.subr.mxu0 0.0
        %2022 = vmatpush1.msra.mxu0 0.0
        %2023 = vmatprep.subr.mxu0 0.0
        %2024 = vmatpush1.msra.mxu0 0.0
        %2025 = vmatprep.subr.mxu0 0.0
        %2026 = vmatpush1.msra.mxu0 0.0
        %2027 = vmatprep.subr.mxu0 0.0
        %2028 = vmatpush1.msra.mxu0 0.0
        %2029 = vmatprep.subr.mxu0 0.0
        %2030 = vmatpush1.msra.mxu0 0.0
        %2031 = vmatprep.subr.mxu0 0.0
        %2032 = vmatpush1.msra.mxu0 0.0
        %2033 = vmatprep.subr.mxu0 0.0
        %2034 = vmatpush1.msra.mxu0 0.0
        %2035 = vmatprep.subr.mxu0 0.0
        %2036 = vmatpush1.msra.mxu0 0.0
        %2037 = vmatprep.subr.mxu0 0.0
        %2038 = vmatpush1.msra.mxu0 0.0
        %2039 = vmatprep.subr.mxu0 0.0
        %2040 = vmatpush1.msra.mxu0 0.0
        %2041 = vmatprep.mubr.f32.mxu0 0.0
        %2042 = vmatmul.mubr.f32.gmra.mrb[0].mxu0 %v1975
        %v2043 = vpop.f32.mrb[0].mxu0
        %v2044 = vadd.f32 0.0, %v2043
        %v2045 = vpop.f32.mrb[0].mxu0
        %2046 = vdwg.mxu0
        %2047 = vrot.lane.b32.xlu0 %v714, 72
        %v2048 = vpop.permute.xlu0 %2047
        %2049 = vrot.lane.b32.xlu0 %v795, 72
        %v2050 = vpop.permute.xlu0 %2049
        %v2051 = vsel %vm881, %v2048, 0
        %v2053 = vsel %vm881, %v2050, 0
        %2055 = vmatprep.subr.mxu0 0.0
        %2056 = vmatpush1.xpose.msra.mxu0 %v2053
        %2057 = vmatprep.subr.mxu0 0.0
        %2058 = vmatpush1.xpose.msra.mxu0 0.0
        %2059 = vmatprep.subr.mxu0 0.0
        %2060 = vmatpush1.xpose.msra.mxu0 0.0
        %2061 = vmatprep.subr.mxu0 0.0
        %2062 = vmatpush1.xpose.msra.mxu0 0.0
        %2063 = vmatprep.subr.mxu0 0.0
        %2064 = vmatpush1.xpose.msra.mxu0 0.0
        %2065 = vmatprep.subr.mxu0 0.0
        %2066 = vmatpush1.xpose.msra.mxu0 0.0
        %2067 = vmatprep.subr.mxu0 0.0
        %2068 = vmatpush1.xpose.msra.mxu0 0.0
        %2069 = vmatprep.subr.mxu0 0.0
        %2070 = vmatpush1.xpose.msra.mxu0 0.0
        %2071 = vmatprep.subr.mxu0 0.0
        %2072 = vmatpush1.xpose.msra.mxu0 0.0
        %2073 = vmatprep.subr.mxu0 0.0
        %2074 = vmatpush1.xpose.msra.mxu0 0.0
        %2075 = vmatprep.subr.mxu0 0.0
        %2076 = vmatpush1.xpose.msra.mxu0 0.0
        %2077 = vmatprep.subr.mxu0 0.0
        %2078 = vmatpush1.xpose.msra.mxu0 0.0
        %2079 = vmatprep.subr.mxu0 0.0
        %2080 = vmatpush1.xpose.msra.mxu0 0.0
        %2081 = vmatprep.subr.mxu0 0.0
        %2082 = vmatpush1.xpose.msra.mxu0 0.0
        %2083 = vmatprep.subr.mxu0 0.0
        %2084 = vmatpush1.xpose.msra.mxu0 0.0
        %2085 = vmatprep.subr.mxu0 0.0
        %2086 = vmatpush1.xpose.msra.mxu0 0.0
        %2087 = vmatprep.subr.mxu0 0.0
        %2088 = vmatpush1.xpose.msra.mxu0 0.0
        %2089 = vmatprep.subr.mxu0 0.0
        %2090 = vmatpush1.xpose.msra.mxu0 0.0
        %2091 = vmatprep.subr.mxu0 0.0
        %2092 = vmatpush1.xpose.msra.mxu0 0.0
        %2093 = vmatprep.subr.mxu0 0.0
        %2094 = vmatpush1.xpose.msra.mxu0 0.0
        %2095 = vmatprep.subr.mxu0 0.0
        %2096 = vmatpush1.xpose.msra.mxu0 0.0
        %2097 = vmatprep.subr.mxu0 0.0
        %2098 = vmatpush1.xpose.msra.mxu0 0.0
        %2099 = vmatprep.subr.mxu0 0.0
        %2100 = vmatpush1.xpose.msra.mxu0 0.0
        %2101 = vmatprep.subr.mxu0 0.0
        %2102 = vmatpush1.xpose.msra.mxu0 0.0
        %2103 = vmatprep.subr.mxu0 0.0
        %2104 = vmatpush1.xpose.msra.mxu0 0.0
        %2105 = vmatprep.subr.mxu0 0.0
        %2106 = vmatpush1.xpose.msra.mxu0 0.0
        %2107 = vmatprep.subr.mxu0 0.0
        %2108 = vmatpush1.xpose.msra.mxu0 0.0
        %2109 = vmatprep.subr.mxu0 0.0
        %2110 = vmatpush1.xpose.msra.mxu0 0.0
        %2111 = vmatprep.subr.mxu0 0.0
        %2112 = vmatpush1.xpose.msra.mxu0 0.0
        %2113 = vmatprep.subr.mxu0 0.0
        %2114 = vmatpush1.xpose.msra.mxu0 0.0
        %2115 = vmatprep.subr.mxu0 0.0
        %2116 = vmatpush1.xpose.msra.mxu0 0.0
        %2117 = vmatprep.subr.mxu0 0.0
        %2118 = vmatpush1.xpose.msra.mxu0 0.0
        %2119 = vmatprep.mubr.f32.mxu0 0.0
        %2120 = vmatmul.mubr.f32.gmra.mrb[0].mxu0 %v2051
        %v2121 = vpop.f32.mrb[0].mxu0
        %v2122 = vadd.f32 0.0, %v2121
        %v2123 = vpop.f32.mrb[0].mxu0
        %2124 = vdwg.mxu0
        %v2125 = vsel %vm880, -1e+20, %v2122
        %v2126 = vmul.f32 %v2125, 0.35355338
        %v2127 = vsel %vm881, %v2126, -inf
        %2128 = vmax.xlane.f32.xlu0 %v2127
        %v2129 = vpop.xlane.xlu0 %2128
        %v2130 = vsub.f32 %v2126, %v2129
        %v2131 = vmul.f32 %v2130, 1.442695
        %v2132 = vpow.pop %v2131
        %v2133 = vsel %vm881, %v2132, 0.0
        %2134 = vadd.xlane.f32.xlu0 %v2133
        %v2135 = vpop.xlane.xlu0 %2134
        %v2136 = vrcp.pop %v2135
        %v2137 = vmul.f32 %v2132, %v2136
        %2138 = vrot.lane.b32.xlu0 %v876, 72
        %v2139 = vpop.permute.xlu0 %2138
        %v2142 = vsel %vm881, %v2137, 0
        %2144 = vmatprep.subr.mxu0 0.0
        %2145 = vmatpush1.msra.mxu0 %v2139
        %2146 = vmatprep.subr.mxu0 0.0
        %2147 = vmatpush1.msra.mxu0 0.0
        %2148 = vmatprep.subr.mxu0 0.0
        %2149 = vmatpush1.msra.mxu0 0.0
        %2150 = vmatprep.subr.mxu0 0.0
        %2151 = vmatpush1.msra.mxu0 0.0
        %2152 = vmatprep.subr.mxu0 0.0
        %2153 = vmatpush1.msra.mxu0 0.0
        %2154 = vmatprep.subr.mxu0 0.0
        %2155 = vmatpush1.msra.mxu0 0.0
        %2156 = vmatprep.subr.mxu0 0.0
        %2157 = vmatpush1.msra.mxu0 0.0
        %2158 = vmatprep.subr.mxu0 0.0
        %2159 = vmatpush1.msra.mxu0 0.0
        %2160 = vmatprep.subr.mxu0 0.0
        %2161 = vmatpush1.msra.mxu0 0.0
        %2162 = vmatprep.subr.mxu0 0.0
        %2163 = vmatpush1.msra.mxu0 0.0
        %2164 = vmatprep.subr.mxu0 0.0
        %2165 = vmatpush1.msra.mxu0 0.0
        %2166 = vmatprep.subr.mxu0 0.0
        %2167 = vmatpush1.msra.mxu0 0.0
        %2168 = vmatprep.subr.mxu0 0.0
        %2169 = vmatpush1.msra.mxu0 0.0
        %2170 = vmatprep.subr.mxu0 0.0
        %2171 = vmatpush1.msra.mxu0 0.0
        %2172 = vmatprep.subr.mxu0 0.0
        %2173 = vmatpush1.msra.mxu0 0.0
        %2174 = vmatprep.subr.mxu0 0.0
        %2175 = vmatpush1.msra.mxu0 0.0
        %2176 = vmatprep.subr.mxu0 0.0
        %2177 = vmatpush1.msra.mxu0 0.0
        %2178 = vmatprep.subr.mxu0 0.0
        %2179 = vmatpush1.msra.mxu0 0.0
        %2180 = vmatprep.subr.mxu0 0.0
        %2181 = vmatpush1.msra.mxu0 0.0
        %2182 = vmatprep.subr.mxu0 0.0
        %2183 = vmatpush1.msra.mxu0 0.0
        %2184 = vmatprep.subr.mxu0 0.0
        %2185 = vmatpush1.msra.mxu0 0.0
        %2186 = vmatprep.subr.mxu0 0.0
        %2187 = vmatpush1.msra.mxu0 0.0
        %2188 = vmatprep.subr.mxu0 0.0
        %2189 = vmatpush1.msra.mxu0 0.0
        %2190 = vmatprep.subr.mxu0 0.0
        %2191 = vmatpush1.msra.mxu0 0.0
        %2192 = vmatprep.subr.mxu0 0.0
        %2193 = vmatpush1.msra.mxu0 0.0
        %2194 = vmatprep.subr.mxu0 0.0
        %2195 = vmatpush1.msra.mxu0 0.0
        %2196 = vmatprep.subr.mxu0 0.0
        %2197 = vmatpush1.msra.mxu0 0.0
        %2198 = vmatprep.subr.mxu0 0.0
        %2199 = vmatpush1.msra.mxu0 0.0
        %2200 = vmatprep.subr.mxu0 0.0
        %2201 = vmatpush1.msra.mxu0 0.0
        %2202 = vmatprep.subr.mxu0 0.0
        %2203 = vmatpush1.msra.mxu0 0.0
        %2204 = vmatprep.subr.mxu0 0.0
        %2205 = vmatpush1.msra.mxu0 0.0
        %2206 = vmatprep.subr.mxu0 0.0
        %2207 = vmatpush1.msra.mxu0 0.0
        %2208 = vmatprep.mubr.f32.mxu0 0.0
        %2209 = vmatmul.mubr.f32.gmra.mrb[0].mxu0 %v2142
        %v2210 = vpop.f32.mrb[0].mxu0
        %v2211 = vadd.f32 0.0, %v2210
        %v2212 = vpop.f32.mrb[0].mxu0
        %2213 = vdwg.mxu0
        %2215 = vrot.lane.b32.xlu0 %v1209, 8
        %v2216 = vpop.permute.xlu0 %2215
        %2219 = vrot.lane.b32.xlu0 %v1376, 16
        %v2220 = vpop.permute.xlu0 %2219
        %2223 = vrot.lane.b32.xlu0 %v1543, 24
        %v2224 = vpop.permute.xlu0 %2223
        %2227 = vrot.lane.b32.xlu0 %v1710, 32
        %v2228 = vpop.permute.xlu0 %2227
        %2231 = vrot.lane.b32.xlu0 %v1877, 40
        %v2232 = vpop.permute.xlu0 %2231
        %2235 = vrot.lane.b32.xlu0 %v2044, 48
        %v2236 = vpop.permute.xlu0 %2235
        %2239 = vrot.lane.b32.xlu0 %v2211, 56
        %v2240 = vpop.permute.xlu0 %2239
        %v2242 = vsel %vm881, %v1041, %v2216
        %vm2243 = vcmask 130048
        %v2244 = vsel %vm2243, %v2242, %v2220
        %vm2245 = vcmask 195584
        %v2246 = vsel %vm2245, %v2244, %v2224
        %vm2247 = vcmask 261120
        %v2248 = vsel %vm2247, %v2246, %v2228
        %vm2249 = vcmask 326656
        %v2250 = vsel %vm2249, %v2248, %v2232
        %vm2251 = vcmask 392192
        %v2252 = vsel %vm2251, %v2250, %v2236
        %vm2253 = vcmask 457728
        %v2254 = vsel %vm2253, %v2252, %v2240
        %v2255 = vld [vmem:[#allocation14] sm:$0xff]
        %v2256 = vld [vmem:[#allocation14 + $0x8] sm:$0xff]
        %v2257 = vld [vmem:[#allocation14 + $0x10] sm:$0xff]
        %v2258 = vld [vmem:[#allocation14 + $0x18] sm:$0xff]
        %v2259 = vld [vmem:[#allocation14 + $0x20] sm:$0xff]
        %v2260 = vld [vmem:[#allocation14 + $0x28] sm:$0xff]
        %v2261 = vld [vmem:[#allocation14 + $0x30] sm:$0xff]
        %v2262 = vld [vmem:[#allocation14 + $0x38] sm:$0xff]
        %v2263 = vld [vmem:[%s9] sm:$0x1]
        %v2265 = vlaneseq
        %v2266 = vshrl.u32 %v2265, 7
        %v2267 = vsub.s32 0, %v2266
        %v2268 = vrot.slane %v2263, %v2267
        %v2271 = vsel %vm643, %v2254, 0
        %2273 = vmatprep.subr.mxu0 0.0
        %2274 = vmatpush1.msra.mxu0 %v2255
        %2275 = vmatprep.subr.mxu0 0.0
        %2276 = vmatpush1.msra.mxu0 %v2256
        %2277 = vmatprep.subr.mxu0 0.0
        %2278 = vmatpush1.msra.mxu0 %v2257
        %2279 = vmatprep.subr.mxu0 0.0
        %2280 = vmatpush1.msra.mxu0 %v2258
        %2281 = vmatprep.subr.mxu0 0.0
        %2282 = vmatpush1.msra.mxu0 %v2259
        %2283 = vmatprep.subr.mxu0 0.0
        %2284 = vmatpush1.msra.mxu0 %v2260
        %2285 = vmatprep.subr.mxu0 0.0
        %2286 = vmatpush1.msra.mxu0 %v2261
        %2287 = vmatprep.subr.mxu0 0.0
        %2288 = vmatpush1.msra.mxu0 %v2262
        %2289 = vmatprep.subr.mxu0 0.0
        %2290 = vmatpush1.msra.mxu0 0.0
        %2291 = vmatprep.subr.mxu0 0.0
        %2292 = vmatpush1.msra.mxu0 0.0
        %2293 = vmatprep.subr.mxu0 0.0
        %2294 = vmatpush1.msra.mxu0 0.0
        %2295 = vmatprep.subr.mxu0 0.0
        %2296 = vmatpush1.msra.mxu0 0.0
        %2297 = vmatprep.subr.mxu0 0.0
        %2298 = vmatpush1.msra.mxu0 0.0
        %2299 = vmatprep.subr.mxu0 0.0
        %2300 = vmatpush1.msra.mxu0 0.0
        %2301 = vmatprep.subr.mxu0 0.0
        %2302 = vmatpush1.msra.mxu0 0.0
        %2303 = vmatprep.subr.mxu0 0.0
        %2304 = vmatpush1.msra.mxu0 0.0
        %2305 = vmatprep.subr.mxu0 0.0
        %2306 = vmatpush1.msra.mxu0 0.0
        %2307 = vmatprep.subr.mxu0 0.0
        %2308 = vmatpush1.msra.mxu0 0.0
        %2309 = vmatprep.subr.mxu0 0.0
        %2310 = vmatpush1.msra.mxu0 0.0
        %2311 = vmatprep.subr.mxu0 0.0
        %2312 = vmatpush1.msra.mxu0 0.0
        %2313 = vmatprep.subr.mxu0 0.0
        %2314 = vmatpush1.msra.mxu0 0.0
        %2315 = vmatprep.subr.mxu0 0.0
        %2316 = vmatpush1.msra.mxu0 0.0
        %2317 = vmatprep.subr.mxu0 0.0
        %2318 = vmatpush1.msra.mxu0 0.0
        %2319 = vmatprep.subr.mxu0 0.0
        %2320 = vmatpush1.msra.mxu0 0.0
        %2321 = vmatprep.subr.mxu0 0.0
        %2322 = vmatpush1.msra.mxu0 0.0
        %2323 = vmatprep.subr.mxu0 0.0
        %2324 = vmatpush1.msra.mxu0 0.0
        %2325 = vmatprep.subr.mxu0 0.0
        %2326 = vmatpush1.msra.mxu0 0.0
        %2327 = vmatprep.subr.mxu0 0.0
        %2328 = vmatpush1.msra.mxu0 0.0
        %2329 = vmatprep.subr.mxu0 0.0
        %2330 = vmatpush1.msra.mxu0 0.0
        %2331 = vmatprep.subr.mxu0 0.0
        %2332 = vmatpush1.msra.mxu0 0.0
        %2333 = vmatprep.subr.mxu0 0.0
        %2334 = vmatpush1.msra.mxu0 0.0
        %2335 = vmatprep.subr.mxu0 0.0
        %2336 = vmatpush1.msra.mxu0 0.0
        %2337 = vmatprep.mubr.f32.mxu0 0.0
        %2338 = vmatmul.mubr.f32.gmra.mrb[0].mxu0 %v2271
        %v2339 = vpop.f32.mrb[0].mxu0
        %v2340 = vadd.f32 %v2268, %v2339
        %v2341 = vpop.f32.mrb[0].mxu0
        %2342 = vdwg.mxu0
        %v2343 = vld [vmem:[%s552] sm:$0xff]
        %v2344 = vadd.f32 %v2340, %v2343
        %v2345 = vsel %vm643, %v2344, 0.0
        %2346 = vadd.xlane.f32.xlu0 %v2345
        %v2347 = vpop.xlane.xlu0 %2346
        %v2348 = vrcp.pop 64.0
        %v2349 = vmul.f32 %v2347, %v2348
        %v2350 = vsub.f32 %v2344, %v2349
        %v2351 = vmul.f32 %v2350, %v2350
        %v2352 = vsel %vm643, %v2351, 0.0
        %2353 = vadd.xlane.f32.xlu0 %v2352
        %v2354 = vpop.xlane.xlu0 %2353
        %v2355 = vmul.f32 %v2354, %v2348
        %v2356 = vadd.f32 %v2355, 1e-05
        %v2357 = vrsqrt.pop %v2356
        %v2358 = vmul.f32 %v2350, %v2357
        %v2359 = vld [vmem:[%s10] sm:$0x1]
        %v2361 = vlaneseq
        %v2362 = vshrl.u32 %v2361, 7
        %v2363 = vsub.s32 0, %v2362
        %v2364 = vrot.slane %v2359, %v2363
        %v2366 = vmul.f32 %v2358, %v2364
        %v2367 = vld [vmem:[%s11] sm:$0x1]
        %v2369 = vlaneseq
        %v2370 = vshrl.u32 %v2369, 7
        %v2371 = vsub.s32 0, %v2370
        %v2372 = vrot.slane %v2367, %v2371
        %v2374 = vadd.f32 %v2366, %v2372
        %2375 = vst.msk [vmem:[%s627] sm:$0xff] %vm643, %v2374
        %s2376 = sand.u32 %s340, 1
        %s2377 = scalar_lea.sflag [#allocation4], %s2376
        %s2378 = sand.u32 %s340, 1
        %s2379 = smul.addr %s2378, 8
        %s2380 = scalar_lea.vmem [#allocation16], %s2379
        // Predicated region
        $region101: #{tpu_custom_call.1} parent=67 // pred_check
          %p2381 = pneg %p350
        $region102: #{tpu_custom_call.1} parent=67 // pred_check_branch
          %2383 = sbr.rel (%p2381) target = $region104
        $region103: #{tpu_custom_call.1} parent=67 // pred_region
          %s2385 = ssub.s32 128, 128
          %2386 = vsyncadd %s2377, %s2385
          %s2387 = sadd.s32 %s42, %s41
          %s2388 = smul.addr %s2387, 128
          %s2389 = scalar_lea.hbm %s12, %s2388
          %s2391 = sshll.u32 %s2380, 4
          %s2392 = int_to_ptr.vmem [resolvable:$true] %s2391
          %2394 = dma.vmem_to_hbm [thread:$0]  %s2392, 128, %s2389, %s2377
        $region104: #{tpu_custom_call.1} parent=67 // pred_fallthru
          _
      $region68: #{tpu_custom_call.1} parent=5 // pred_fallthru
        _
      %p2395 = scmp.le.s32.totalorder 2, %s32
      // Predicated region
      $region105: #{tpu_custom_call.1} parent=5 // pred_check
        %p2396 = pneg %p2395
      $region106: #{tpu_custom_call.1} parent=5 // pred_check_branch
        %2398 = sbr.rel (%p2396) target = $region108
      $region107: #{tpu_custom_call.1} parent=5 // pred_region
        %s2399 = ssub.s32 %s32, 2
        // Predicated region
        $region109: #{tpu_custom_call.1} parent=107 // pred_check
          %p2400 = pneg %p356
        $region110: #{tpu_custom_call.1} parent=107 // pred_check_branch
          %2402 = sbr.rel (%p2400) target = $region112
        $region111: #{tpu_custom_call.1} parent=107 // pred_region
          %s2403 = sand.u32 %s341, 1
          %s2404 = scalar_lea.sflag [#allocation4], %s2403
          %s2405 = sand.u32 %s341, 1
          %s2406 = smul.addr %s2405, 8
          %s2407 = scalar_lea.vmem [#allocation16], %s2406
          %2408 = dma.done %s2404, 128
        $region112: #{tpu_custom_call.1} parent=107 // pred_fallthru
          _
      $region108: #{tpu_custom_call.1} parent=5 // pred_fallthru
        _
    $region6: #{tpu_custom_call.1} parent=1 // loop_footer
      %s36 = sadd.s32 1, %s32
    $region7: #{tpu_custom_call.1} parent=1 // loop_footer_branch
      %31 = sbr.rel target = $region3
    $region8: #{tpu_custom_call.1} parent=1 // loop_exit
      _
    %2409 = vsyncpa [#allocation3], 1
    %s2410 = scalar_lea.sflag [#allocation3], 1
    %2411 = vsyncpa %s2410, 1
    %2412 = vsyncpa [#allocation6], 1
    %s2413 = scalar_lea.sflag [#allocation6], 1
    %2414 = vsyncpa %s2413, 1
    %2415 = vsyncpa [#allocation9], 1
    %s2416 = scalar_lea.sflag [#allocation9], 1
    %2417 = vsyncpa %s2416, 1
    %2418 = vsyncpa [#allocation12], 1
    %2419 = vsyncpa [#allocation15], 1
    %2420 = vsyncpa [#allocation4], 1
    %s2421 = scalar_lea.sflag [#allocation4], 1
    %2422 = vsyncpa %s2421, 1

</llo_original>
